<compile_context>
chip_gen: v7x
topology: tpu7x:2x2x1
jax: 0.10.0
libtpu: 0.0.40
codegen_flags: <defaults>
</compile_context>

<pallas_src>
import math
from functools import partial

import jax
import jax.numpy as jnp
from jax import lax
from jax.experimental import pallas as pl
from jax.experimental.pallas import tpu as pltpu


def _attn_kernel(x_ref, wq_ref, wk_ref, wv_ref, bq_ref, bk_ref, bv_ref,
                 wproj_ref, bproj_ref,
                 y_ref, k_ref, v_ref,
                 yacc_ref,
                 *, n_head: int, n_embd: int, seq_len: int, q_tile: int):
    """Refs (batch dim squeezed via None block dims):

    x_ref     : (T, C)    input for this batch element
    wq/wk/wv  : (C, C)    c_attn weight slices, pre-transposed, bf16
    bq/bk/bv  : (1, C)    c_attn bias slices, f32
    wproj_ref : (C, C)    c_proj weight, pre-transposed, bf16
    bproj_ref : (1, C)    c_proj bias, f32
    y_ref     : (tq, C)   output tile
    k_ref     : (T, C)    present-K slab (lane dense), resident across qi
    v_ref     : (T, C)    present-V slab (lane dense), resident across qi
    yacc_ref  : (tq, C)   f32 scratch slab for per-head attention outputs
    """
    T, C, nh, tq = seq_len, n_embd, n_head, q_tile
    hd = C // nh
    scale = 1.0 / math.sqrt(hd)
    qi = pl.program_id(1)

    # ---- once per batch element: full-sequence K/V projection (bf16 MXU) ----
    @pl.when(qi == 0)
    def _():
        x_full = x_ref[...].astype(jnp.bfloat16)                        # (T, C)
        k_full = jnp.dot(x_full, wk_ref[...],
                         preferred_element_type=jnp.float32) + bk_ref[0]
        v_full = jnp.dot(x_full, wv_ref[...],
                         preferred_element_type=jnp.float32) + bv_ref[0]
        k_ref[...] = k_full.astype(k_ref.dtype)
        v_ref[...] = v_full.astype(v_ref.dtype)

    # ---- per q-tile: Q projection, scale folded into Q ----------------------
    row0 = pl.multiple_of(qi * tq, tq)
    x_tile = x_ref[pl.ds(row0, tq), :].astype(jnp.bfloat16)             # (tq, C)
    q_f32 = jnp.dot(x_tile, wq_ref[...],
                    preferred_element_type=jnp.float32) + bq_ref[0]
    q_bf = (q_f32 * scale).astype(jnp.bfloat16)                         # (tq, C)

    k_all = k_ref[...].astype(jnp.bfloat16)                             # (T, C)
    v_all = v_ref[...].astype(jnp.bfloat16)                             # (T, C)

    # Causal mask for this query tile (global query index vs key index).
    row = qi * tq + lax.broadcasted_iota(jnp.int32, (tq, T), 0)
    col = lax.broadcasted_iota(jnp.int32, (tq, T), 1)
    causal = col <= row
    neg_big = jnp.float32(-1e30)   # finite bias: no -inf - -inf NaN hazards

    # Per-head attention; each head lands at its column slice of the scratch
    # slab (bounded live ranges, no concat).
    for h in range(nh):
        lo, hi = h * hd, (h + 1) * hd
        # contract on hd directly -- no materialized k.T (no XLU transpose)
        att = lax.dot_general(q_bf[:, lo:hi], k_all[:, lo:hi],
                              (((1,), (1,)), ((), ())),
                              preferred_element_type=jnp.float32)       # (tq, T)
        att = jnp.where(causal, att, neg_big)
        att = att - jnp.max(att, axis=-1, keepdims=True)
        p = jnp.exp(att)
        p = p * pl.reciprocal(jnp.sum(p, axis=-1, keepdims=True), approx=True)
        y_h = jnp.dot(p.astype(jnp.bfloat16), v_all[:, lo:hi],
                      preferred_element_type=jnp.float32)               # (tq, hd)
        yacc_ref[:, lo:hi] = y_h

    # ---- output projection for this q-tile (single full-K MXU matmul) -------
    y_out = jnp.dot(yacc_ref[...].astype(jnp.bfloat16), wproj_ref[...],
                    preferred_element_type=jnp.float32) + bproj_ref[0]
    y_ref[...] = y_out.astype(y_ref.dtype)


def _pick_q_tile(T: int) -> int:
    for cand in (256, 128, 64, 32, 16, 8):
        if T % cand == 0:
            return min(cand, T)
    return T


def causal_self_attention(x, w_attn, b_attn, w_proj, b_proj, *, n_head,
                          q_tile=None, compute_dtype=jnp.bfloat16):
    """x: (B, T, C); w_attn: (3C, C) PyTorch layout; w_proj: (C, C) PyTorch layout.

    Returns (y, (k, v)) with k, v shaped (B, n_head, T, head_dim) like PyTorch.
    """
    B, T, C = x.shape
    assert C % n_head == 0
    hd = C // n_head
    if q_tile is None:
        q_tile = _pick_q_tile(T)
    assert T % q_tile == 0
    nq = T // q_tile

    w_attn = jnp.asarray(w_attn)
    w_proj = jnp.asarray(w_proj)
    b_attn = jnp.asarray(b_attn)
    b_proj = jnp.asarray(b_proj)

    # Pre-transpose so the kernel computes x @ W (lane-dense outputs), split
    # q/k/v, and cast weights to bf16 (native MXU dtype, half the DMA/VMEM).
    # Biases stay f32 and are added after the f32-accumulated matmul.
    w_attn_t = w_attn.T.astype(compute_dtype)                    # (C, 3C)
    wq = w_attn_t[:, 0 * C:1 * C]
    wk = w_attn_t[:, 1 * C:2 * C]
    wv = w_attn_t[:, 2 * C:3 * C]
    wp = w_proj.T.astype(compute_dtype)                          # (C, C)
    bq = b_attn[0 * C:1 * C].reshape(1, C).astype(jnp.float32)
    bk = b_attn[1 * C:2 * C].reshape(1, C).astype(jnp.float32)
    bv = b_attn[2 * C:3 * C].reshape(1, C).astype(jnp.float32)
    bp = b_proj.reshape(1, C).astype(jnp.float32)

    kernel = partial(_attn_kernel, n_head=n_head, n_embd=C, seq_len=T,
                     q_tile=q_tile)

    out_shapes = (
        jax.ShapeDtypeStruct((B, T, C), x.dtype),   # y
        jax.ShapeDtypeStruct((B, T, C), x.dtype),   # present K (lane-dense slab)
        jax.ShapeDtypeStruct((B, T, C), x.dtype),   # present V (lane-dense slab)
    )

    grid_spec = pltpu.PrefetchScalarGridSpec(
        num_scalar_prefetch=0,
        grid=(B, nq),
        in_specs=[
            pl.BlockSpec((None, T, C), lambda b, q: (b, 0, 0)),   # x
            pl.BlockSpec((C, C), lambda b, q: (0, 0)),            # wq
            pl.BlockSpec((C, C), lambda b, q: (0, 0)),            # wk
            pl.BlockSpec((C, C), lambda b, q: (0, 0)),            # wv
            pl.BlockSpec((1, C), lambda b, q: (0, 0)),            # bq
            pl.BlockSpec((1, C), lambda b, q: (0, 0)),            # bk
            pl.BlockSpec((1, C), lambda b, q: (0, 0)),            # bv
            pl.BlockSpec((C, C), lambda b, q: (0, 0)),            # wproj
            pl.BlockSpec((1, C), lambda b, q: (0, 0)),            # bproj
        ],
        out_specs=[
            pl.BlockSpec((None, q_tile, C), lambda b, q: (b, q, 0)),  # y tile
            pl.BlockSpec((None, T, C), lambda b, q: (b, 0, 0)),       # K slab
            pl.BlockSpec((None, T, C), lambda b, q: (b, 0, 0)),       # V slab
        ],
        scratch_shapes=[pltpu.VMEM((q_tile, C), jnp.float32)],
    )

    # Advisory cost estimate for XLA's scheduler.
    itemsize = jnp.dtype(x.dtype).itemsize
    flops = B * (8 * T * C * C + 4 * T * T * C)
    transcendentals = B * n_head * T * T
    bytes_accessed = (B * T * C * itemsize                # x
                      + 4 * C * C * 2 + 4 * C * 4         # bf16 weights, f32 biases
                      + 3 * B * T * C * itemsize)         # y, k, v
    cost = pl.CostEstimate(flops=flops, transcendentals=transcendentals,
                           bytes_accessed=bytes_accessed)

    # Rough per-step VMEM need (double-buffered x/y + resident k/v + weights +
    # scratch), with headroom, capped at v7x's 64 MiB physical VMEM.
    vmem_need = (2 * (T * C + q_tile * C) * itemsize
                 + 2 * T * C * itemsize
                 + 2 * 4 * C * C * 2
                 + q_tile * C * 4)
    vmem_limit = int(min(max(2 * vmem_need, 32 * 1024 * 1024), 64 * 1024 * 1024))

    y, k_slab, v_slab = pl.pallas_call(
        kernel,
        out_shape=out_shapes,
        grid_spec=grid_spec,
        compiler_params=pltpu.CompilerParams(
            dimension_semantics=("parallel", "arbitrary"),
            vmem_limit_bytes=vmem_limit),
        cost_estimate=cost,
    )(x, wq, wk, wv, bq, bk, bv, wp, bp)

    # Present cache in the PyTorch layout (B, n_head, T, hd) -- cheap XLA
    # layout plumbing outside the kernel (keeps kernel stores lane-dense).
    k_out = k_slab.reshape(B, T, n_head, hd).transpose(0, 2, 1, 3)
    v_out = v_slab.reshape(B, T, n_head, hd).transpose(0, 2, 1, 3)
    return y, (k_out, v_out)


def _reference(x, w_attn, b_attn, w_proj, b_proj, n_head):
    """Pure-JAX f32 reference mirroring the PyTorch forward (eval mode)."""
    B, T, C = x.shape
    hd = C // n_head
    qkv = x @ w_attn.T + b_attn
    q, k, v = jnp.split(qkv, 3, axis=2)

    def heads(t):
        return t.reshape(B, T, n_head, hd).transpose(0, 2, 1, 3)

    q, k, v = heads(q), heads(k), heads(v)
    att = (q @ jnp.swapaxes(k, -2, -1)) / math.sqrt(hd)
    mask = jnp.tril(jnp.ones((T, T), bool))
    att = jnp.where(mask[None, None], att, -jnp.inf)
    att = jax.nn.softmax(att, axis=-1)
    y = att @ v
    y = y.transpose(0, 2, 1, 3).reshape(B, T, C)
    y = y @ w_proj.T + b_proj
    return y, (k, v)


def _check(name, a, b, atol=3e-2, rtol=3e-2):
    if not jnp.allclose(a, b, atol=atol, rtol=rtol):
        diff = float(jnp.max(jnp.abs(a - b)))
        raise AssertionError(f"{name} mismatch: max|diff|={diff:.3e}")


if __name__ == "__main__":
    B, T, n_embd, n_head = 2, 8, 32, 4
    key = jax.random.PRNGKey(0)
    kx, kw1, kb1, kw2, kb2 = jax.random.split(key, 5)

    bound1 = 1.0 / math.sqrt(n_embd)
    x = jax.random.normal(kx, (B, T, n_embd), dtype=jnp.float32)
    w_attn = jax.random.uniform(kw1, (3 * n_embd, n_embd), jnp.float32, -bound1, bound1)
    b_attn = jax.random.uniform(kb1, (3 * n_embd,), jnp.float32, -bound1, bound1)
    w_proj = jax.random.uniform(kw2, (n_embd, n_embd), jnp.float32, -bound1, bound1)
    b_proj = jax.random.uniform(kb2, (n_embd,), jnp.float32, -bound1, bound1)

    y, (k_out, v_out) = causal_self_attention(
        x, w_attn, b_attn, w_proj, b_proj, n_head=n_head)
    jax.block_until_ready((y, k_out, v_out))

    y_ref, (k_ref, v_ref) = _reference(x, w_attn, b_attn, w_proj, b_proj, n_head)
    # Tolerances account for bf16 MXU operands + approx softmax reciprocal vs
    # the pure-f32 reference.
    _check("y", y, y_ref)
    _check("present_k", k_out, k_ref)
    _check("present_v", v_out, v_ref)

    print("KERNEL_OK")
</pallas_src>

<mosaic_0001>
module attributes {stable_mosaic.version = 11 : i64} {
  func.func @_attn_kernel(%arg0: i32, %arg1: i32, %arg2: memref<1x8x32xf32, #tpu.memory_space<vmem>>, %arg3: memref<32x32xbf16, #tpu.memory_space<vmem>>, %arg4: memref<32x32xbf16, #tpu.memory_space<vmem>>, %arg5: memref<32x32xbf16, #tpu.memory_space<vmem>>, %arg6: memref<1x32xf32, #tpu.memory_space<vmem>>, %arg7: memref<1x32xf32, #tpu.memory_space<vmem>>, %arg8: memref<1x32xf32, #tpu.memory_space<vmem>>, %arg9: memref<32x32xbf16, #tpu.memory_space<vmem>>, %arg10: memref<1x32xf32, #tpu.memory_space<vmem>>, %arg11: memref<1x8x32xf32, #tpu.memory_space<vmem>>, %arg12: memref<1x8x32xf32, #tpu.memory_space<vmem>>, %arg13: memref<1x8x32xf32, #tpu.memory_space<vmem>>, %arg14: memref<8x32xf32, #tpu.memory_space<vmem>>) attributes {dimension_semantics = [#tpu.dimension_semantics<parallel>, #tpu.dimension_semantics<arbitrary>], iteration_bounds = array<i64: 2, 1>, scalar_prefetch = 0 : i64, scratch_operands = 1 : i64, tpu.core_type = #tpu.core_type<tc>, window_params = [{transform_indices = @transform_0, window_bounds = array<i64: 1, 8, 32>}, {pipeline_mode = #tpu.pipeline_mode<synchronous>, transform_indices = @transform_1, window_bounds = array<i64: 32, 32>}, {pipeline_mode = #tpu.pipeline_mode<synchronous>, transform_indices = @transform_2, window_bounds = array<i64: 32, 32>}, {pipeline_mode = #tpu.pipeline_mode<synchronous>, transform_indices = @transform_3, window_bounds = array<i64: 32, 32>}, {pipeline_mode = #tpu.pipeline_mode<synchronous>, transform_indices = @transform_4, window_bounds = array<i64: 1, 32>}, {pipeline_mode = #tpu.pipeline_mode<synchronous>, transform_indices = @transform_5, window_bounds = array<i64: 1, 32>}, {pipeline_mode = #tpu.pipeline_mode<synchronous>, transform_indices = @transform_6, window_bounds = array<i64: 1, 32>}, {pipeline_mode = #tpu.pipeline_mode<synchronous>, transform_indices = @transform_7, window_bounds = array<i64: 32, 32>}, {pipeline_mode = #tpu.pipeline_mode<synchronous>, transform_indices = @transform_8, window_bounds = array<i64: 1, 32>}, {transform_indices = @transform_9, window_bounds = array<i64: 1, 8, 32>}, {transform_indices = @transform_10, window_bounds = array<i64: 1, 8, 32>}, {transform_indices = @transform_11, window_bounds = array<i64: 1, 8, 32>}]} {
    %c0_i32 = arith.constant 0 : i32
    %0 = arith.cmpi eq, %arg1, %c0_i32 : i32
    %1 = arith.extui %0 : i1 to i32
    %c0_i32_0 = arith.constant 0 : i32
    %2 = arith.cmpi ne, %1, %c0_i32_0 : i32
    scf.if %2 {
      %c0_49 = arith.constant 0 : index
      %c0_50 = arith.constant 0 : index
      %c0_51 = arith.constant 0 : index
      %119 = vector.load %arg2[%c0_49, %c0_50, %c0_51] : memref<1x8x32xf32, #tpu.memory_space<vmem>>, vector<1x8x32xf32>
      %120 = vector.shape_cast %119 : vector<1x8x32xf32> to vector<8x32xf32>
      %121 = arith.truncf %120 : vector<8x32xf32> to vector<8x32xbf16>
      %c0_52 = arith.constant 0 : index
      %c0_53 = arith.constant 0 : index
      %122 = vector.load %arg4[%c0_52, %c0_53] : memref<32x32xbf16, #tpu.memory_space<vmem>>, vector<32x32xbf16>
      %cst_54 = arith.constant dense<0.000000e+00> : vector<8x32xf32>
      %123 = tpu.matmul %121, %122, %cst_54 {dimension_numbers = #tpu.dot_dimension_numbers<[1], [0], [0], [1], [0, 0, 1, 1], [], []>} : vector<8x32xbf16>, vector<32x32xbf16>, vector<8x32xf32> -> vector<8x32xf32>
      %c0_55 = arith.constant 0 : index
      %c0_56 = arith.constant 0 : index
      %124 = vector.load %arg7[%c0_55, %c0_56] : memref<1x32xf32, #tpu.memory_space<vmem>>, vector<1x32xf32>
      %125 = vector.shape_cast %124 : vector<1x32xf32> to vector<32xf32>
      %126 = vector.shape_cast %125 : vector<32xf32> to vector<1x32xf32>
      %127 = vector.broadcast %126 : vector<1x32xf32> to vector<8x32xf32>
      %128 = arith.addf %123, %127 : vector<8x32xf32>
      %c0_57 = arith.constant 0 : index
      %c0_58 = arith.constant 0 : index
      %129 = vector.load %arg5[%c0_57, %c0_58] : memref<32x32xbf16, #tpu.memory_space<vmem>>, vector<32x32xbf16>
      %cst_59 = arith.constant dense<0.000000e+00> : vector<8x32xf32>
      %130 = tpu.matmul %121, %129, %cst_59 {dimension_numbers = #tpu.dot_dimension_numbers<[1], [0], [0], [1], [0, 0, 1, 1], [], []>} : vector<8x32xbf16>, vector<32x32xbf16>, vector<8x32xf32> -> vector<8x32xf32>
      %c0_60 = arith.constant 0 : index
      %c0_61 = arith.constant 0 : index
      %131 = vector.load %arg8[%c0_60, %c0_61] : memref<1x32xf32, #tpu.memory_space<vmem>>, vector<1x32xf32>
      %132 = vector.shape_cast %131 : vector<1x32xf32> to vector<32xf32>
      %133 = vector.shape_cast %132 : vector<32xf32> to vector<1x32xf32>
      %134 = vector.broadcast %133 : vector<1x32xf32> to vector<8x32xf32>
      %135 = arith.addf %130, %134 : vector<8x32xf32>
      %c0_62 = arith.constant 0 : index
      %c0_63 = arith.constant 0 : index
      %c0_64 = arith.constant 0 : index
      %136 = vector.load %arg12[%c0_62, %c0_63, %c0_64] : memref<1x8x32xf32, #tpu.memory_space<vmem>>, vector<1x8x32xf32>
      %137 = vector.shape_cast %136 : vector<1x8x32xf32> to vector<8x32xf32>
      %138 = vector.shape_cast %128 : vector<8x32xf32> to vector<1x8x32xf32>
      tpu.vector_store %arg12[%c0_62, %c0_63, %c0_64], %138 {strides = array<i32>} : memref<1x8x32xf32, #tpu.memory_space<vmem>>, vector<1x8x32xf32>,
      %c0_65 = arith.constant 0 : index
      %c0_66 = arith.constant 0 : index
      %c0_67 = arith.constant 0 : index
      %139 = vector.load %arg13[%c0_65, %c0_66, %c0_67] : memref<1x8x32xf32, #tpu.memory_space<vmem>>, vector<1x8x32xf32>
      %140 = vector.shape_cast %139 : vector<1x8x32xf32> to vector<8x32xf32>
      %141 = vector.shape_cast %135 : vector<8x32xf32> to vector<1x8x32xf32>
      tpu.vector_store %arg13[%c0_65, %c0_66, %c0_67], %141 {strides = array<i32>} : memref<1x8x32xf32, #tpu.memory_space<vmem>>, vector<1x8x32xf32>,
    } else {
    }
    %c8_i32 = arith.constant 8 : i32
    %3 = arith.muli %arg1, %c8_i32 : i32
    %4 = tpu.assume_multiple %3, 8 : i32
    %c0 = arith.constant 0 : index
    %5 = arith.index_cast %4 : i32 to index
    %c0_1 = arith.constant 0 : index
    %6 = vector.load %arg2[%c0, %5, %c0_1] : memref<1x8x32xf32, #tpu.memory_space<vmem>>, vector<1x8x32xf32>
    %7 = vector.shape_cast %6 : vector<1x8x32xf32> to vector<8x32xf32>
    %8 = arith.truncf %7 : vector<8x32xf32> to vector<8x32xbf16>
    %c0_2 = arith.constant 0 : index
    %c0_3 = arith.constant 0 : index
    %9 = vector.load %arg3[%c0_2, %c0_3] : memref<32x32xbf16, #tpu.memory_space<vmem>>, vector<32x32xbf16>
    %cst = arith.constant dense<0.000000e+00> : vector<8x32xf32>
    %10 = tpu.matmul %8, %9, %cst {dimension_numbers = #tpu.dot_dimension_numbers<[1], [0], [0], [1], [0, 0, 1, 1], [], []>} : vector<8x32xbf16>, vector<32x32xbf16>, vector<8x32xf32> -> vector<8x32xf32>
    %c0_4 = arith.constant 0 : index
    %c0_5 = arith.constant 0 : index
    %11 = vector.load %arg6[%c0_4, %c0_5] : memref<1x32xf32, #tpu.memory_space<vmem>>, vector<1x32xf32>
    %12 = vector.shape_cast %11 : vector<1x32xf32> to vector<32xf32>
    %13 = vector.shape_cast %12 : vector<32xf32> to vector<1x32xf32>
    %14 = vector.broadcast %13 : vector<1x32xf32> to vector<8x32xf32>
    %15 = arith.addf %10, %14 : vector<8x32xf32>
    %cst_6 = arith.constant 0.353553385 : f32
    %16 = vector.broadcast %cst_6 : f32 to vector<8x32xf32>
    %17 = arith.mulf %15, %16 : vector<8x32xf32>
    %18 = arith.truncf %17 : vector<8x32xf32> to vector<8x32xbf16>
    %c0_7 = arith.constant 0 : index
    %c0_8 = arith.constant 0 : index
    %c0_9 = arith.constant 0 : index
    %19 = vector.load %arg12[%c0_7, %c0_8, %c0_9] : memref<1x8x32xf32, #tpu.memory_space<vmem>>, vector<1x8x32xf32>
    %20 = vector.shape_cast %19 : vector<1x8x32xf32> to vector<8x32xf32>
    %21 = arith.truncf %20 : vector<8x32xf32> to vector<8x32xbf16>
    %c0_10 = arith.constant 0 : index
    %c0_11 = arith.constant 0 : index
    %c0_12 = arith.constant 0 : index
    %22 = vector.load %arg13[%c0_10, %c0_11, %c0_12] : memref<1x8x32xf32, #tpu.memory_space<vmem>>, vector<1x8x32xf32>
    %23 = vector.shape_cast %22 : vector<1x8x32xf32> to vector<8x32xf32>
    %24 = arith.truncf %23 : vector<8x32xf32> to vector<8x32xbf16>
    %c8_i32_13 = arith.constant 8 : i32
    %25 = arith.muli %arg1, %c8_i32_13 : i32
    %26 = tpu.iota {dimensions = array<i32: 0>} : vector<8x8xi32>
    %27 = vector.broadcast %25 : i32 to vector<8x8xi32>
    %28 = arith.addi %27, %26 : vector<8x8xi32>
    %29 = tpu.iota {dimensions = array<i32: 1>} : vector<8x8xi32>
    %30 = arith.cmpi sle, %29, %28 : vector<8x8xi32>
    %31 = vector.extract_strided_slice %18 {offsets = [0, 0], sizes = [8, 8], strides = [1, 1]} : vector<8x32xbf16> to vector<8x8xbf16>
    %32 = vector.extract_strided_slice %21 {offsets = [0, 0], sizes = [8, 8], strides = [1, 1]} : vector<8x32xbf16> to vector<8x8xbf16>
    %cst_14 = arith.constant dense<0.000000e+00> : vector<8x8xf32>
    %33 = tpu.matmul %31, %32, %cst_14 {dimension_numbers = #tpu.dot_dimension_numbers<[1], [1], [0], [0], [0, 0, 1, 0], [], []>} : vector<8x8xbf16>, vector<8x8xbf16>, vector<8x8xf32> -> vector<8x8xf32>
    %cst_15 = arith.constant -1.000000e+30 : f32
    %34 = vector.broadcast %cst_15 : f32 to vector<8x8xf32>
    %35 = arith.select %30, %33, %34 : vector<8x8xi1>, vector<8x8xf32>
    %cst_16 = arith.constant dense<0xFF800000> : vector<8xf32>
    %36 = vector.multi_reduction <maximumf>, %35, %cst_16 [1] : vector<8x8xf32> to vector<8xf32>
    %37 = vector.shape_cast %36 : vector<8xf32> to vector<8x1xf32>
    %38 = vector.broadcast %37 : vector<8x1xf32> to vector<8x8xf32>
    %39 = arith.subf %35, %38 : vector<8x8xf32>
    %40 = math.exp %39 : vector<8x8xf32>
    %cst_17 = arith.constant dense<0.000000e+00> : vector<8xf32>
    %41 = vector.multi_reduction <add>, %40, %cst_17 [1] : vector<8x8xf32> to vector<8xf32>
    %42 = vector.shape_cast %41 : vector<8xf32> to vector<8x1xf32>
    %43 = tpu.reciprocal %42 {approx = true} : vector<8x1xf32> -> vector<8x1xf32>
    %44 = vector.broadcast %43 : vector<8x1xf32> to vector<8x8xf32>
    %45 = arith.mulf %40, %44 : vector<8x8xf32>
    %46 = arith.truncf %45 : vector<8x8xf32> to vector<8x8xbf16>
    %47 = vector.extract_strided_slice %24 {offsets = [0, 0], sizes = [8, 8], strides = [1, 1]} : vector<8x32xbf16> to vector<8x8xbf16>
    %cst_18 = arith.constant dense<0.000000e+00> : vector<8x8xf32>
    %48 = tpu.matmul %46, %47, %cst_18 {dimension_numbers = #tpu.dot_dimension_numbers<[1], [0], [0], [1], [0, 0, 1, 1], [], []>} : vector<8x8xbf16>, vector<8x8xbf16>, vector<8x8xf32> -> vector<8x8xf32>
    %c0_19 = arith.constant 0 : index
    %c0_20 = arith.constant 0 : index
    %49 = vector.load %arg14[%c0_19, %c0_20] : memref<8x32xf32, #tpu.memory_space<vmem>>, vector<8x8xf32>
    tpu.vector_store %arg14[%c0_19, %c0_20], %48 {strides = array<i32>} : memref<8x32xf32, #tpu.memory_space<vmem>>, vector<8x8xf32>,
    %50 = vector.extract_strided_slice %18 {offsets = [0, 8], sizes = [8, 8], strides = [1, 1]} : vector<8x32xbf16> to vector<8x8xbf16>
    %51 = vector.extract_strided_slice %21 {offsets = [0, 8], sizes = [8, 8], strides = [1, 1]} : vector<8x32xbf16> to vector<8x8xbf16>
    %cst_21 = arith.constant dense<0.000000e+00> : vector<8x8xf32>
    %52 = tpu.matmul %50, %51, %cst_21 {dimension_numbers = #tpu.dot_dimension_numbers<[1], [1], [0], [0], [0, 0, 1, 0], [], []>} : vector<8x8xbf16>, vector<8x8xbf16>, vector<8x8xf32> -> vector<8x8xf32>
    %cst_22 = arith.constant -1.000000e+30 : f32
    %53 = vector.broadcast %cst_22 : f32 to vector<8x8xf32>
    %54 = arith.select %30, %52, %53 : vector<8x8xi1>, vector<8x8xf32>
    %cst_23 = arith.constant dense<0xFF800000> : vector<8xf32>
    %55 = vector.multi_reduction <maximumf>, %54, %cst_23 [1] : vector<8x8xf32> to vector<8xf32>
    %56 = vector.shape_cast %55 : vector<8xf32> to vector<8x1xf32>
    %57 = vector.broadcast %56 : vector<8x1xf32> to vector<8x8xf32>
    %58 = arith.subf %54, %57 : vector<8x8xf32>
    %59 = math.exp %58 : vector<8x8xf32>
    %cst_24 = arith.constant dense<0.000000e+00> : vector<8xf32>
    %60 = vector.multi_reduction <add>, %59, %cst_24 [1] : vector<8x8xf32> to vector<8xf32>
    %61 = vector.shape_cast %60 : vector<8xf32> to vector<8x1xf32>
    %62 = tpu.reciprocal %61 {approx = true} : vector<8x1xf32> -> vector<8x1xf32>
    %63 = vector.broadcast %62 : vector<8x1xf32> to vector<8x8xf32>
    %64 = arith.mulf %59, %63 : vector<8x8xf32>
    %65 = arith.truncf %64 : vector<8x8xf32> to vector<8x8xbf16>
    %66 = vector.extract_strided_slice %24 {offsets = [0, 8], sizes = [8, 8], strides = [1, 1]} : vector<8x32xbf16> to vector<8x8xbf16>
    %cst_25 = arith.constant dense<0.000000e+00> : vector<8x8xf32>
    %67 = tpu.matmul %65, %66, %cst_25 {dimension_numbers = #tpu.dot_dimension_numbers<[1], [0], [0], [1], [0, 0, 1, 1], [], []>} : vector<8x8xbf16>, vector<8x8xbf16>, vector<8x8xf32> -> vector<8x8xf32>
    %c0_26 = arith.constant 0 : index
    %c8 = arith.constant 8 : index
    %68 = vector.load %arg14[%c0_26, %c8] : memref<8x32xf32, #tpu.memory_space<vmem>>, vector<8x8xf32>
    tpu.vector_store %arg14[%c0_26, %c8], %67 {strides = array<i32>} : memref<8x32xf32, #tpu.memory_space<vmem>>, vector<8x8xf32>,
    %69 = vector.extract_strided_slice %18 {offsets = [0, 16], sizes = [8, 8], strides = [1, 1]} : vector<8x32xbf16> to vector<8x8xbf16>
    %70 = vector.extract_strided_slice %21 {offsets = [0, 16], sizes = [8, 8], strides = [1, 1]} : vector<8x32xbf16> to vector<8x8xbf16>
    %cst_27 = arith.constant dense<0.000000e+00> : vector<8x8xf32>
    %71 = tpu.matmul %69, %70, %cst_27 {dimension_numbers = #tpu.dot_dimension_numbers<[1], [1], [0], [0], [0, 0, 1, 0], [], []>} : vector<8x8xbf16>, vector<8x8xbf16>, vector<8x8xf32> -> vector<8x8xf32>
    %cst_28 = arith.constant -1.000000e+30 : f32
    %72 = vector.broadcast %cst_28 : f32 to vector<8x8xf32>
    %73 = arith.select %30, %71, %72 : vector<8x8xi1>, vector<8x8xf32>
    %cst_29 = arith.constant dense<0xFF800000> : vector<8xf32>
    %74 = vector.multi_reduction <maximumf>, %73, %cst_29 [1] : vector<8x8xf32> to vector<8xf32>
    %75 = vector.shape_cast %74 : vector<8xf32> to vector<8x1xf32>
    %76 = vector.broadcast %75 : vector<8x1xf32> to vector<8x8xf32>
    %77 = arith.subf %73, %76 : vector<8x8xf32>
    %78 = math.exp %77 : vector<8x8xf32>
    %cst_30 = arith.constant dense<0.000000e+00> : vector<8xf32>
    %79 = vector.multi_reduction <add>, %78, %cst_30 [1] : vector<8x8xf32> to vector<8xf32>
    %80 = vector.shape_cast %79 : vector<8xf32> to vector<8x1xf32>
    %81 = tpu.reciprocal %80 {approx = true} : vector<8x1xf32> -> vector<8x1xf32>
    %82 = vector.broadcast %81 : vector<8x1xf32> to vector<8x8xf32>
    %83 = arith.mulf %78, %82 : vector<8x8xf32>
    %84 = arith.truncf %83 : vector<8x8xf32> to vector<8x8xbf16>
    %85 = vector.extract_strided_slice %24 {offsets = [0, 16], sizes = [8, 8], strides = [1, 1]} : vector<8x32xbf16> to vector<8x8xbf16>
    %cst_31 = arith.constant dense<0.000000e+00> : vector<8x8xf32>
    %86 = tpu.matmul %84, %85, %cst_31 {dimension_numbers = #tpu.dot_dimension_numbers<[1], [0], [0], [1], [0, 0, 1, 1], [], []>} : vector<8x8xbf16>, vector<8x8xbf16>, vector<8x8xf32> -> vector<8x8xf32>
    %c0_32 = arith.constant 0 : index
    %c16 = arith.constant 16 : index
    %87 = vector.load %arg14[%c0_32, %c16] : memref<8x32xf32, #tpu.memory_space<vmem>>, vector<8x8xf32>
    tpu.vector_store %arg14[%c0_32, %c16], %86 {strides = array<i32>} : memref<8x32xf32, #tpu.memory_space<vmem>>, vector<8x8xf32>,
    %88 = vector.extract_strided_slice %18 {offsets = [0, 24], sizes = [8, 8], strides = [1, 1]} : vector<8x32xbf16> to vector<8x8xbf16>
    %89 = vector.extract_strided_slice %21 {offsets = [0, 24], sizes = [8, 8], strides = [1, 1]} : vector<8x32xbf16> to vector<8x8xbf16>
    %cst_33 = arith.constant dense<0.000000e+00> : vector<8x8xf32>
    %90 = tpu.matmul %88, %89, %cst_33 {dimension_numbers = #tpu.dot_dimension_numbers<[1], [1], [0], [0], [0, 0, 1, 0], [], []>} : vector<8x8xbf16>, vector<8x8xbf16>, vector<8x8xf32> -> vector<8x8xf32>
    %cst_34 = arith.constant -1.000000e+30 : f32
    %91 = vector.broadcast %cst_34 : f32 to vector<8x8xf32>
    %92 = arith.select %30, %90, %91 : vector<8x8xi1>, vector<8x8xf32>
    %cst_35 = arith.constant dense<0xFF800000> : vector<8xf32>
    %93 = vector.multi_reduction <maximumf>, %92, %cst_35 [1] : vector<8x8xf32> to vector<8xf32>
    %94 = vector.shape_cast %93 : vector<8xf32> to vector<8x1xf32>
    %95 = vector.broadcast %94 : vector<8x1xf32> to vector<8x8xf32>
    %96 = arith.subf %92, %95 : vector<8x8xf32>
    %97 = math.exp %96 : vector<8x8xf32>
    %cst_36 = arith.constant dense<0.000000e+00> : vector<8xf32>
    %98 = vector.multi_reduction <add>, %97, %cst_36 [1] : vector<8x8xf32> to vector<8xf32>
    %99 = vector.shape_cast %98 : vector<8xf32> to vector<8x1xf32>
    %100 = tpu.reciprocal %99 {approx = true} : vector<8x1xf32> -> vector<8x1xf32>
    %101 = vector.broadcast %100 : vector<8x1xf32> to vector<8x8xf32>
    %102 = arith.mulf %97, %101 : vector<8x8xf32>
    %103 = arith.truncf %102 : vector<8x8xf32> to vector<8x8xbf16>
    %104 = vector.extract_strided_slice %24 {offsets = [0, 24], sizes = [8, 8], strides = [1, 1]} : vector<8x32xbf16> to vector<8x8xbf16>
    %cst_37 = arith.constant dense<0.000000e+00> : vector<8x8xf32>
    %105 = tpu.matmul %103, %104, %cst_37 {dimension_numbers = #tpu.dot_dimension_numbers<[1], [0], [0], [1], [0, 0, 1, 1], [], []>} : vector<8x8xbf16>, vector<8x8xbf16>, vector<8x8xf32> -> vector<8x8xf32>
    %c0_38 = arith.constant 0 : index
    %c24 = arith.constant 24 : index
    %106 = vector.load %arg14[%c0_38, %c24] : memref<8x32xf32, #tpu.memory_space<vmem>>, vector<8x8xf32>
    tpu.vector_store %arg14[%c0_38, %c24], %105 {strides = array<i32>} : memref<8x32xf32, #tpu.memory_space<vmem>>, vector<8x8xf32>,
    %c0_39 = arith.constant 0 : index
    %c0_40 = arith.constant 0 : index
    %107 = vector.load %arg14[%c0_39, %c0_40] : memref<8x32xf32, #tpu.memory_space<vmem>>, vector<8x32xf32>
    %108 = arith.truncf %107 : vector<8x32xf32> to vector<8x32xbf16>
    %c0_41 = arith.constant 0 : index
    %c0_42 = arith.constant 0 : index
    %109 = vector.load %arg9[%c0_41, %c0_42] : memref<32x32xbf16, #tpu.memory_space<vmem>>, vector<32x32xbf16>
    %cst_43 = arith.constant dense<0.000000e+00> : vector<8x32xf32>
    %110 = tpu.matmul %108, %109, %cst_43 {dimension_numbers = #tpu.dot_dimension_numbers<[1], [0], [0], [1], [0, 0, 1, 1], [], []>} : vector<8x32xbf16>, vector<32x32xbf16>, vector<8x32xf32> -> vector<8x32xf32>
    %c0_44 = arith.constant 0 : index
    %c0_45 = arith.constant 0 : index
    %111 = vector.load %arg10[%c0_44, %c0_45] : memref<1x32xf32, #tpu.memory_space<vmem>>, vector<1x32xf32>
    %112 = vector.shape_cast %111 : vector<1x32xf32> to vector<32xf32>
    %113 = vector.shape_cast %112 : vector<32xf32> to vector<1x32xf32>
    %114 = vector.broadcast %113 : vector<1x32xf32> to vector<8x32xf32>
    %115 = arith.addf %110, %114 : vector<8x32xf32>
    %c0_46 = arith.constant 0 : index
    %c0_47 = arith.constant 0 : index
    %c0_48 = arith.constant 0 : index
    %116 = vector.load %arg11[%c0_46, %c0_47, %c0_48] : memref<1x8x32xf32, #tpu.memory_space<vmem>>, vector<1x8x32xf32>
    %117 = vector.shape_cast %116 : vector<1x8x32xf32> to vector<8x32xf32>
    %118 = vector.shape_cast %115 : vector<8x32xf32> to vector<1x8x32xf32>
    tpu.vector_store %arg11[%c0_46, %c0_47, %c0_48], %118 {strides = array<i32>} : memref<1x8x32xf32, #tpu.memory_space<vmem>>, vector<1x8x32xf32>,
    return
  }
  func.func @transform_0(%arg0: i32, %arg1: i32) -> (i32, i32, i32) {
    %c0_i32 = arith.constant 0 : i32
    %c0_i32_0 = arith.constant 0 : i32
    %c0_i32_1 = arith.constant 0 : i32
    return %arg0, %c0_i32, %c0_i32_0 : i32, i32, i32
  }
  func.func @transform_1(%arg0: i32, %arg1: i32) -> (i32, i32) {
    %c0_i32 = arith.constant 0 : i32
    %c0_i32_0 = arith.constant 0 : i32
    %c0_i32_1 = arith.constant 0 : i32
    return %c0_i32, %c0_i32_0 : i32, i32
  }
  func.func @transform_2(%arg0: i32, %arg1: i32) -> (i32, i32) {
    %c0_i32 = arith.constant 0 : i32
    %c0_i32_0 = arith.constant 0 : i32
    %c0_i32_1 = arith.constant 0 : i32
    return %c0_i32, %c0_i32_0 : i32, i32
  }
  func.func @transform_3(%arg0: i32, %arg1: i32) -> (i32, i32) {
    %c0_i32 = arith.constant 0 : i32
    %c0_i32_0 = arith.constant 0 : i32
    %c0_i32_1 = arith.constant 0 : i32
    return %c0_i32, %c0_i32_0 : i32, i32
  }
  func.func @transform_4(%arg0: i32, %arg1: i32) -> (i32, i32) {
    %c0_i32 = arith.constant 0 : i32
    %c0_i32_0 = arith.constant 0 : i32
    %c0_i32_1 = arith.constant 0 : i32
    return %c0_i32, %c0_i32_0 : i32, i32
  }
  func.func @transform_5(%arg0: i32, %arg1: i32) -> (i32, i32) {
    %c0_i32 = arith.constant 0 : i32
    %c0_i32_0 = arith.constant 0 : i32
    %c0_i32_1 = arith.constant 0 : i32
    return %c0_i32, %c0_i32_0 : i32, i32
  }
  func.func @transform_6(%arg0: i32, %arg1: i32) -> (i32, i32) {
    %c0_i32 = arith.constant 0 : i32
    %c0_i32_0 = arith.constant 0 : i32
    %c0_i32_1 = arith.constant 0 : i32
    return %c0_i32, %c0_i32_0 : i32, i32
  }
  func.func @transform_7(%arg0: i32, %arg1: i32) -> (i32, i32) {
    %c0_i32 = arith.constant 0 : i32
    %c0_i32_0 = arith.constant 0 : i32
    %c0_i32_1 = arith.constant 0 : i32
    return %c0_i32, %c0_i32_0 : i32, i32
  }
  func.func @transform_8(%arg0: i32, %arg1: i32) -> (i32, i32) {
    %c0_i32 = arith.constant 0 : i32
    %c0_i32_0 = arith.constant 0 : i32
    %c0_i32_1 = arith.constant 0 : i32
    return %c0_i32, %c0_i32_0 : i32, i32
  }
  func.func @transform_9(%arg0: i32, %arg1: i32) -> (i32, i32, i32) {
    %c0_i32 = arith.constant 0 : i32
    %c0_i32_0 = arith.constant 0 : i32
    return %arg0, %arg1, %c0_i32 : i32, i32, i32
  }
  func.func @transform_10(%arg0: i32, %arg1: i32) -> (i32, i32, i32) {
    %c0_i32 = arith.constant 0 : i32
    %c0_i32_0 = arith.constant 0 : i32
    %c0_i32_1 = arith.constant 0 : i32
    return %arg0, %c0_i32, %c0_i32_0 : i32, i32, i32
  }
  func.func @transform_11(%arg0: i32, %arg1: i32) -> (i32, i32, i32) {
    %c0_i32 = arith.constant 0 : i32
    %c0_i32_0 = arith.constant 0 : i32
    %c0_i32_1 = arith.constant 0 : i32
    return %arg0, %c0_i32, %c0_i32_0 : i32, i32, i32
  }
}

</mosaic_0001>

<llo_original>
// kernel: tpu_custom_call.1
$region0: #{tpu_custom_call.1}
  #allocation0 [shape = 'u32[]', space=smem, size = 0x4, offset = 0x4, fixed_abs, tag = 'smem constant byte address 0x4 - core index']
  #allocation1 [shape = 'u32[144,128]{1,0:T(1,128)}', space=vmem, size = 0x12000, scoped, tag = 'internal scratch']
  #allocation2 [shape = 'f32[8,32]{1,0:T(8,128)}', space=vmem, size = 0x1000, scoped, tag = 'scratch operand']
  %s0 = inlined_call_operand.hbm [shape: f32[2,8,32], index: 0, kind: input, shape index: {}]
  %s1 = inlined_call_operand.hbm [shape: bf16[32,32], index: 1, kind: input, shape index: {}]
  %s2 = inlined_call_operand.hbm [shape: bf16[32,32], index: 2, kind: input, shape index: {}]
  %s3 = inlined_call_operand.hbm [shape: bf16[32,32], index: 3, kind: input, shape index: {}]
  %s4 = inlined_call_operand.vmem [shape: f32[1,32], index: 4, kind: input, shape index: {}]
  %s5 = inlined_call_operand.vmem [shape: f32[1,32], index: 5, kind: input, shape index: {}]
  %s6 = inlined_call_operand.vmem [shape: f32[1,32], index: 6, kind: input, shape index: {}]
  %s7 = inlined_call_operand.vmem [shape: bf16[32,32], index: 7, kind: input, shape index: {}]
  %s8 = inlined_call_operand.vmem [shape: f32[1,32], index: 8, kind: input, shape index: {}]
  %s9 = inlined_call_operand.hbm [shape: f32[2,8,32], index: 9, kind: output, shape index: {0}]
  %s10 = inlined_call_operand.hbm [shape: f32[2,8,32], index: 10, kind: output, shape index: {1}]
  %s11 = inlined_call_operand.hbm [shape: f32[2,8,32], index: 11, kind: output, shape index: {2}]
  %12 = xla_tuple %s9, %s10, %s11
  %s13 = sld [smem:[#allocation0]]
  $region105: #{tpu_custom_call.1} parent=0
    _
  %s15 = ssub.s32 1, %s13
  %s16 = scalar_select 0, %s15, %s13
  $region1: #{tpu_custom_call.1} parent=0
    #allocation3 [shape = 'u8[8192]{0}', space=vmem, size = 0x2000, scoped, tag = 'input window, operand 0']
    #allocation4 [shape = 's32[2]{0}', space=sflag, size = 0x8, scoped, tag = 'scoped memory for tpu_custom_call.1']
    #allocation5 [shape = 's32[2]{0}', space=sflag, size = 0x8, scoped, tag = 'scoped memory for tpu_custom_call.1']
    #allocation6 [shape = 'u8[8192]{0}', space=vmem, size = 0x2000, scoped, tag = 'input window, operand 1, single buffered']
    #allocation7 [shape = 's32[1]{0}', space=sflag, size = 0x4, scoped, tag = 'scoped memory for tpu_custom_call.1']
    #allocation8 [shape = 'u8[8192]{0}', space=vmem, size = 0x2000, scoped, tag = 'input window, operand 2, single buffered']
    #allocation9 [shape = 'u8[8192]{0}', space=vmem, size = 0x2000, scoped, tag = 'input window, operand 3, single buffered']
    #allocation10 [shape = 's32[1]{0}', space=sflag, size = 0x4, scoped, tag = 'scoped memory for tpu_custom_call.1']
    #allocation11 [shape = 'u8[8192]{0}', space=vmem, size = 0x2000, scoped, tag = 'output window, operand 0']
    #allocation12 [shape = 'u8[8192]{0}', space=vmem, size = 0x2000, scoped, tag = 'output window, operand 1']
    #allocation13 [shape = 's32[2]{0}', space=sflag, size = 0x8, scoped, tag = 'scoped memory for tpu_custom_call.1']
    #allocation14 [shape = 'u8[8192]{0}', space=vmem, size = 0x2000, scoped, tag = 'output window, operand 2']
    %17 = vsyncpa [#allocation4], 0
    %s18 = scalar_lea.sflag [#allocation4], 1
    %19 = vsyncpa %s18, 0
    %20 = vsyncpa [#allocation7], 0
    %21 = vsyncpa [#allocation10], 0
    %22 = vsyncpa [#allocation5], 0
    %s23 = scalar_lea.sflag [#allocation5], 1
    %24 = vsyncpa %s23, 0
    %25 = vsyncpa [#allocation13], 0
    %s26 = scalar_lea.sflag [#allocation13], 1
    %27 = vsyncpa %s26, 0
    loop: start=0, step=1, limit=4
    $region2: #{tpu_custom_call.1} parent=1 // loop_pre_header
      _
    $region3: #{tpu_custom_call.1} parent=1 // loop_header
      %s29 = sphi 0, %s33
      %p30 = scmp.ge.s32.totalorder %s29, 4
      %s36 = sphi 0, %s48
      %s37 = sphi 0, %s44
      %s38 = sphi 0, %s36
      %s39 = sphi 0, %s37
      %s40 = sphi 0, %s38
      %s41 = sphi 0, %s39
      %s51 = sphi 0, %s53
      %s54 = sphi 0, %s51
      %s55 = sphi 0, %s54
      %s71 = sphi 0, %s55
      %s75 = sphi 0, %s75
      %s77 = sphi 0, %s75
      %s78 = sphi 0, %s77
      %s92 = sphi 0, %s78
      %s96 = sphi 0, %s96
      %s98 = sphi 0, %s96
      %s99 = sphi 0, %s98
      %s113 = sphi 0, %s99
      %s117 = sphi 0, %s117
      %s119 = sphi 0, %s117
      %s120 = sphi 0, %s119
      %s134 = sphi 0, %s120
      %s138 = sphi 0, %s138
      %s140 = sphi 0, %s138
      %s141 = sphi 0, %s140
      %s155 = sphi 0, %s141
      %s159 = sphi 0, %s159
      %s161 = sphi 0, %s159
      %s162 = sphi 0, %s161
      %s176 = sphi 0, %s162
      %s180 = sphi 0, %s180
      %s182 = sphi 0, %s180
      %s183 = sphi 0, %s182
      %s197 = sphi 0, %s183
      %s201 = sphi 0, %s201
      %s203 = sphi 0, %s201
      %s204 = sphi 0, %s203
      %s218 = sphi 0, %s204
      %s222 = sphi 0, %s222
      %s224 = sphi 0, %s222
      %s225 = sphi 0, %s224
      %s239 = sphi 0, %s225
      %s247 = sphi 0, %s249
      %s250 = sphi 0, %s247
      %s251 = sphi 0, %s250
      %s267 = sphi 0, %s251
      %s273 = sphi 0, %s275
      %s276 = sphi 0, %s273
      %s277 = sphi 0, %s276
      %s293 = sphi 0, %s277
      %s299 = sphi 0, %s301
      %s302 = sphi 0, %s299
      %s303 = sphi 0, %s302
      %s319 = sphi 0, %s303
    $region4: #{tpu_custom_call.1} parent=1 // loop_header_branch
      %32 = sbr.rel (%p30) target = $region8
    $region5: #{tpu_custom_call.1} parent=1 // loop_body
      %s34 = ssub.s32 %s29, 1
      %s35 = ssub.s32 %s29, 2
      %s42 = sadd.s32 1, %s37
      %p43 = scmp.ge.s32.totalorder %s42, 1
      %s44 = scalar_select %p43, 0, %s42
      %s45 = sadd.s32 1, %s36
      %s46 = scalar_select %p43, %s45, %s36
      %p47 = scmp.ge.s32.totalorder %s46, 2
      %s48 = scalar_select %p47, 0, %s46
      %s49 = ssub.s32 %s36, %s48
      %p50 = scmp.eq.s32.totalorder %s49, 0
      %s52 = sadd.s32 %s51, 1
      %s53 = scalar_select %p50, %s51, %s52
      %p56 = pneg %p50
      %p57 = scmp.eq.s32.totalorder %s29, 1
      %p58 = por %p56, %p57
      %p59 = scmp.ne.s32.totalorder %s51, %s54
      %p60 = scmp.eq.s32.totalorder %s29, 0
      %p61 = por %p59, %p60
      %p62 = scmp.ne.s32.totalorder %s51, %s54
      %p63 = scmp.eq.s32.totalorder %s34, 1
      %p64 = por %p62, %p63
      %p65 = scmp.ne.s32.totalorder %s54, %s55
      %p66 = scmp.eq.s32.totalorder %s34, 0
      %p67 = por %p65, %p66
      %p68 = scmp.ne.s32.totalorder %s54, %s55
      %p69 = scmp.eq.s32.totalorder %s35, 1
      %p70 = por %p68, %p69
      %p72 = scmp.ne.s32.totalorder %s55, %s71
      %p73 = scmp.eq.s32.totalorder %s35, 0
      %p74 = por %p72, %p73
      %s76 = sadd.s32 %s75, 1
      %p79 = scmp.eq.s32.totalorder %s29, 1
      %p80 = scmp.ne.s32.totalorder %s75, %s77
      %p81 = scmp.eq.s32.totalorder %s29, 0
      %p82 = por %p80, %p81
      %p83 = scmp.ne.s32.totalorder %s75, %s77
      %p84 = scmp.eq.s32.totalorder %s34, 1
      %p85 = por %p83, %p84
      %p86 = scmp.ne.s32.totalorder %s77, %s78
      %p87 = scmp.eq.s32.totalorder %s34, 0
      %p88 = por %p86, %p87
      %p89 = scmp.ne.s32.totalorder %s77, %s78
      %p90 = scmp.eq.s32.totalorder %s35, 1
      %p91 = por %p89, %p90
      %p93 = scmp.ne.s32.totalorder %s78, %s92
      %p94 = scmp.eq.s32.totalorder %s35, 0
      %p95 = por %p93, %p94
      %s97 = sadd.s32 %s96, 1
      %p100 = scmp.eq.s32.totalorder %s29, 1
      %p101 = scmp.ne.s32.totalorder %s96, %s98
      %p102 = scmp.eq.s32.totalorder %s29, 0
      %p103 = por %p101, %p102
      %p104 = scmp.ne.s32.totalorder %s96, %s98
      %p105 = scmp.eq.s32.totalorder %s34, 1
      %p106 = por %p104, %p105
      %p107 = scmp.ne.s32.totalorder %s98, %s99
      %p108 = scmp.eq.s32.totalorder %s34, 0
      %p109 = por %p107, %p108
      %p110 = scmp.ne.s32.totalorder %s98, %s99
      %p111 = scmp.eq.s32.totalorder %s35, 1
      %p112 = por %p110, %p111
      %p114 = scmp.ne.s32.totalorder %s99, %s113
      %p115 = scmp.eq.s32.totalorder %s35, 0
      %p116 = por %p114, %p115
      %s118 = sadd.s32 %s117, 1
      %p121 = scmp.eq.s32.totalorder %s29, 1
      %p122 = scmp.ne.s32.totalorder %s117, %s119
      %p123 = scmp.eq.s32.totalorder %s29, 0
      %p124 = por %p122, %p123
      %p125 = scmp.ne.s32.totalorder %s117, %s119
      %p126 = scmp.eq.s32.totalorder %s34, 1
      %p127 = por %p125, %p126
      %p128 = scmp.ne.s32.totalorder %s119, %s120
      %p129 = scmp.eq.s32.totalorder %s34, 0
      %p130 = por %p128, %p129
      %p131 = scmp.ne.s32.totalorder %s119, %s120
      %p132 = scmp.eq.s32.totalorder %s35, 1
      %p133 = por %p131, %p132
      %p135 = scmp.ne.s32.totalorder %s120, %s134
      %p136 = scmp.eq.s32.totalorder %s35, 0
      %p137 = por %p135, %p136
      %s139 = sadd.s32 %s138, 1
      %p142 = scmp.eq.s32.totalorder %s29, 1
      %p143 = scmp.ne.s32.totalorder %s138, %s140
      %p144 = scmp.eq.s32.totalorder %s29, 0
      %p145 = por %p143, %p144
      %p146 = scmp.ne.s32.totalorder %s138, %s140
      %p147 = scmp.eq.s32.totalorder %s34, 1
      %p148 = por %p146, %p147
      %p149 = scmp.ne.s32.totalorder %s140, %s141
      %p150 = scmp.eq.s32.totalorder %s34, 0
      %p151 = por %p149, %p150
      %p152 = scmp.ne.s32.totalorder %s140, %s141
      %p153 = scmp.eq.s32.totalorder %s35, 1
      %p154 = por %p152, %p153
      %p156 = scmp.ne.s32.totalorder %s141, %s155
      %p157 = scmp.eq.s32.totalorder %s35, 0
      %p158 = por %p156, %p157
      %s160 = sadd.s32 %s159, 1
      %p163 = scmp.eq.s32.totalorder %s29, 1
      %p164 = scmp.ne.s32.totalorder %s159, %s161
      %p165 = scmp.eq.s32.totalorder %s29, 0
      %p166 = por %p164, %p165
      %p167 = scmp.ne.s32.totalorder %s159, %s161
      %p168 = scmp.eq.s32.totalorder %s34, 1
      %p169 = por %p167, %p168
      %p170 = scmp.ne.s32.totalorder %s161, %s162
      %p171 = scmp.eq.s32.totalorder %s34, 0
      %p172 = por %p170, %p171
      %p173 = scmp.ne.s32.totalorder %s161, %s162
      %p174 = scmp.eq.s32.totalorder %s35, 1
      %p175 = por %p173, %p174
      %p177 = scmp.ne.s32.totalorder %s162, %s176
      %p178 = scmp.eq.s32.totalorder %s35, 0
      %p179 = por %p177, %p178
      %s181 = sadd.s32 %s180, 1
      %p184 = scmp.eq.s32.totalorder %s29, 1
      %p185 = scmp.ne.s32.totalorder %s180, %s182
      %p186 = scmp.eq.s32.totalorder %s29, 0
      %p187 = por %p185, %p186
      %p188 = scmp.ne.s32.totalorder %s180, %s182
      %p189 = scmp.eq.s32.totalorder %s34, 1
      %p190 = por %p188, %p189
      %p191 = scmp.ne.s32.totalorder %s182, %s183
      %p192 = scmp.eq.s32.totalorder %s34, 0
      %p193 = por %p191, %p192
      %p194 = scmp.ne.s32.totalorder %s182, %s183
      %p195 = scmp.eq.s32.totalorder %s35, 1
      %p196 = por %p194, %p195
      %p198 = scmp.ne.s32.totalorder %s183, %s197
      %p199 = scmp.eq.s32.totalorder %s35, 0
      %p200 = por %p198, %p199
      %s202 = sadd.s32 %s201, 1
      %p205 = scmp.eq.s32.totalorder %s29, 1
      %p206 = scmp.ne.s32.totalorder %s201, %s203
      %p207 = scmp.eq.s32.totalorder %s29, 0
      %p208 = por %p206, %p207
      %p209 = scmp.ne.s32.totalorder %s201, %s203
      %p210 = scmp.eq.s32.totalorder %s34, 1
      %p211 = por %p209, %p210
      %p212 = scmp.ne.s32.totalorder %s203, %s204
      %p213 = scmp.eq.s32.totalorder %s34, 0
      %p214 = por %p212, %p213
      %p215 = scmp.ne.s32.totalorder %s203, %s204
      %p216 = scmp.eq.s32.totalorder %s35, 1
      %p217 = por %p215, %p216
      %p219 = scmp.ne.s32.totalorder %s204, %s218
      %p220 = scmp.eq.s32.totalorder %s35, 0
      %p221 = por %p219, %p220
      %s223 = sadd.s32 %s222, 1
      %p226 = scmp.eq.s32.totalorder %s29, 1
      %p227 = scmp.ne.s32.totalorder %s222, %s224
      %p228 = scmp.eq.s32.totalorder %s29, 0
      %p229 = por %p227, %p228
      %p230 = scmp.ne.s32.totalorder %s222, %s224
      %p231 = scmp.eq.s32.totalorder %s34, 1
      %p232 = por %p230, %p231
      %p233 = scmp.ne.s32.totalorder %s224, %s225
      %p234 = scmp.eq.s32.totalorder %s34, 0
      %p235 = por %p233, %p234
      %p236 = scmp.ne.s32.totalorder %s224, %s225
      %p237 = scmp.eq.s32.totalorder %s35, 1
      %p238 = por %p236, %p237
      %p240 = scmp.ne.s32.totalorder %s225, %s239
      %p241 = scmp.eq.s32.totalorder %s35, 0
      %p242 = por %p240, %p241
      %s243 = ssub.s32 %s36, %s48
      %s244 = ssub.s32 %s37, %s44
      %s245 = sor.u32 %s243, %s244
      %p246 = scmp.eq.s32.totalorder %s245, 0
      %s248 = sadd.s32 %s247, 1
      %s249 = scalar_select %p246, %s247, %s248
      %p252 = pneg %p246
      %p253 = scmp.eq.s32.totalorder %s29, 1
      %p254 = por %p252, %p253
      %p255 = scmp.ne.s32.totalorder %s247, %s250
      %p256 = scmp.eq.s32.totalorder %s29, 0
      %p257 = por %p255, %p256
      %p258 = scmp.ne.s32.totalorder %s247, %s250
      %p259 = scmp.eq.s32.totalorder %s34, 1
      %p260 = por %p258, %p259
      %p261 = scmp.ne.s32.totalorder %s250, %s251
      %p262 = scmp.eq.s32.totalorder %s34, 0
      %p263 = por %p261, %p262
      %p264 = scmp.ne.s32.totalorder %s250, %s251
      %p265 = scmp.eq.s32.totalorder %s35, 1
      %p266 = por %p264, %p265
      %p268 = scmp.ne.s32.totalorder %s251, %s267
      %p269 = scmp.eq.s32.totalorder %s35, 0
      %p270 = por %p268, %p269
      %s271 = ssub.s32 %s36, %s48
      %p272 = scmp.eq.s32.totalorder %s271, 0
      %s274 = sadd.s32 %s273, 1
      %s275 = scalar_select %p272, %s273, %s274
      %p278 = pneg %p272
      %p279 = scmp.eq.s32.totalorder %s29, 1
      %p280 = por %p278, %p279
      %p281 = scmp.ne.s32.totalorder %s273, %s276
      %p282 = scmp.eq.s32.totalorder %s29, 0
      %p283 = por %p281, %p282
      %p284 = scmp.ne.s32.totalorder %s273, %s276
      %p285 = scmp.eq.s32.totalorder %s34, 1
      %p286 = por %p284, %p285
      %p287 = scmp.ne.s32.totalorder %s276, %s277
      %p288 = scmp.eq.s32.totalorder %s34, 0
      %p289 = por %p287, %p288
      %p290 = scmp.ne.s32.totalorder %s276, %s277
      %p291 = scmp.eq.s32.totalorder %s35, 1
      %p292 = por %p290, %p291
      %p294 = scmp.ne.s32.totalorder %s277, %s293
      %p295 = scmp.eq.s32.totalorder %s35, 0
      %p296 = por %p294, %p295
      %s297 = ssub.s32 %s36, %s48
      %p298 = scmp.eq.s32.totalorder %s297, 0
      %s300 = sadd.s32 %s299, 1
      %s301 = scalar_select %p298, %s299, %s300
      %p304 = pneg %p298
      %p305 = scmp.eq.s32.totalorder %s29, 1
      %p306 = por %p304, %p305
      %p307 = scmp.ne.s32.totalorder %s299, %s302
      %p308 = scmp.eq.s32.totalorder %s29, 0
      %p309 = por %p307, %p308
      %p310 = scmp.ne.s32.totalorder %s299, %s302
      %p311 = scmp.eq.s32.totalorder %s34, 1
      %p312 = por %p310, %p311
      %p313 = scmp.ne.s32.totalorder %s302, %s303
      %p314 = scmp.eq.s32.totalorder %s34, 0
      %p315 = por %p313, %p314
      %p316 = scmp.ne.s32.totalorder %s302, %s303
      %p317 = scmp.eq.s32.totalorder %s35, 1
      %p318 = por %p316, %p317
      %p320 = scmp.ne.s32.totalorder %s303, %s319
      %p321 = scmp.eq.s32.totalorder %s35, 0
      %p322 = por %p320, %p321
      %p323 = scmp.le.s32.totalorder 1, %s29
      %p324 = scmp.lt.s32.totalorder %s29, 3
      %p325 = pnand %p323, %p324
      %p326 = pneg %p325
      // Predicated region
      $region9: #{tpu_custom_call.1} parent=5 // pred_check
        _
      $region10: #{tpu_custom_call.1} parent=5 // pred_check_branch
        %328 = sbr.rel (%p325) target = $region12
      $region11: #{tpu_custom_call.1} parent=5 // pred_region
        %s329 = ssub.s32 %s29, 1
        // Predicated region
        $region13: #{tpu_custom_call.1} parent=11 // pred_check
          %p330 = pneg %p88
        $region14: #{tpu_custom_call.1} parent=11 // pred_check_branch
          %332 = sbr.rel (%p330) target = $region16
        $region15: #{tpu_custom_call.1} parent=11 // pred_region
          %s334 = ssub.s32 256, 256
          %335 = vsyncadd [#allocation7], %s334
          %s336 = sshll.u32 [#allocation6], 4
          %s337 = int_to_ptr.vmem [resolvable:$true] %s336
          %342 = dma.hbm_to_vmem [thread:$0]  %s1, 256, %s337, [#allocation7], 64, 64, 4
        $region16: #{tpu_custom_call.1} parent=11 // pred_fallthru
          _
        // Predicated region
        $region17: #{tpu_custom_call.1} parent=11 // pred_check
          %p343 = pneg %p109
        $region18: #{tpu_custom_call.1} parent=11 // pred_check_branch
          %345 = sbr.rel (%p343) target = $region20
        $region19: #{tpu_custom_call.1} parent=11 // pred_region
          %s347 = ssub.s32 256, 256
          %348 = vsyncadd [#allocation7], %s347
          %s349 = sshll.u32 [#allocation8], 4
          %s350 = int_to_ptr.vmem [resolvable:$true] %s349
          %355 = dma.hbm_to_vmem [thread:$0]  %s2, 256, %s350, [#allocation7], 64, 64, 4
        $region20: #{tpu_custom_call.1} parent=11 // pred_fallthru
          _
        // Predicated region
        $region21: #{tpu_custom_call.1} parent=11 // pred_check
          %p356 = pneg %p130
        $region22: #{tpu_custom_call.1} parent=11 // pred_check_branch
          %358 = sbr.rel (%p356) target = $region24
        $region23: #{tpu_custom_call.1} parent=11 // pred_region
          %s360 = ssub.s32 256, 256
          %361 = vsyncadd [#allocation10], %s360
          %s362 = sshll.u32 [#allocation9], 4
          %s363 = int_to_ptr.vmem [resolvable:$true] %s362
          %368 = dma.hbm_to_vmem [thread:$0]  %s3, 256, %s363, [#allocation10], 64, 64, 4
        $region24: #{tpu_custom_call.1} parent=11 // pred_fallthru
          _
        // Predicated region
        $region25: #{tpu_custom_call.1} parent=11 // pred_check
          %p369 = pneg %p151
        $region26: #{tpu_custom_call.1} parent=11 // pred_check_branch
          %371 = sbr.rel (%p369) target = $region28
        $region27: #{tpu_custom_call.1} parent=11 // pred_region
          _
        $region28: #{tpu_custom_call.1} parent=11 // pred_fallthru
          _
        // Predicated region
        $region29: #{tpu_custom_call.1} parent=11 // pred_check
          %p372 = pneg %p172
        $region30: #{tpu_custom_call.1} parent=11 // pred_check_branch
          %374 = sbr.rel (%p372) target = $region32
        $region31: #{tpu_custom_call.1} parent=11 // pred_region
          _
        $region32: #{tpu_custom_call.1} parent=11 // pred_fallthru
          _
        // Predicated region
        $region33: #{tpu_custom_call.1} parent=11 // pred_check
          %p375 = pneg %p193
        $region34: #{tpu_custom_call.1} parent=11 // pred_check_branch
          %377 = sbr.rel (%p375) target = $region36
        $region35: #{tpu_custom_call.1} parent=11 // pred_region
          _
        $region36: #{tpu_custom_call.1} parent=11 // pred_fallthru
          _
        // Predicated region
        $region37: #{tpu_custom_call.1} parent=11 // pred_check
          %p378 = pneg %p214
        $region38: #{tpu_custom_call.1} parent=11 // pred_check_branch
          %380 = sbr.rel (%p378) target = $region40
        $region39: #{tpu_custom_call.1} parent=11 // pred_region
          _
        $region40: #{tpu_custom_call.1} parent=11 // pred_fallthru
          _
        // Predicated region
        $region41: #{tpu_custom_call.1} parent=11 // pred_check
          %p381 = pneg %p235
        $region42: #{tpu_custom_call.1} parent=11 // pred_check_branch
          %383 = sbr.rel (%p381) target = $region44
        $region43: #{tpu_custom_call.1} parent=11 // pred_region
          _
        $region44: #{tpu_custom_call.1} parent=11 // pred_fallthru
          _
      $region12: #{tpu_custom_call.1} parent=5 // pred_fallthru
        _
      %p384 = scmp.lt.s32.totalorder %s29, 2
      // Predicated region
      $region45: #{tpu_custom_call.1} parent=5 // pred_check
        %p385 = pneg %p384
      $region46: #{tpu_custom_call.1} parent=5 // pred_check_branch
        %387 = sbr.rel (%p385) target = $region48
      $region47: #{tpu_custom_call.1} parent=5 // pred_region
        // Predicated region
        $region49: #{tpu_custom_call.1} parent=47 // pred_check
          %p388 = pneg %p61
        $region50: #{tpu_custom_call.1} parent=47 // pred_check_branch
          %390 = sbr.rel (%p388) target = $region52
        $region51: #{tpu_custom_call.1} parent=47 // pred_region
          %s391 = sand.u32 %s51, 1
          %s392 = scalar_lea.sflag [#allocation4], %s391
          %s393 = sand.u32 %s51, 1
          %s394 = smul.addr %s393, 8
          %s395 = scalar_lea.vmem [#allocation3], %s394
          %s397 = ssub.s32 128, 128
          %398 = vsyncadd %s392, %s397
          %s399 = smul.addr %s36, 128
          %s400 = scalar_lea.hbm %s0, %s399
          %s402 = sshll.u32 %s395, 4
          %s403 = int_to_ptr.vmem [resolvable:$true] %s402
          %405 = dma.hbm_to_vmem [thread:$0]  %s400, 128, %s403, %s392
        $region52: #{tpu_custom_call.1} parent=47 // pred_fallthru
          _
      $region48: #{tpu_custom_call.1} parent=5 // pred_fallthru
        _
      %p406 = scmp.le.s32.totalorder 1, %s29
      %p407 = scmp.lt.s32.totalorder %s29, 3
      %p408 = pnand %p406, %p407
      %p409 = pneg %p408
      // Predicated region
      $region53: #{tpu_custom_call.1} parent=5 // pred_check
        _
      $region54: #{tpu_custom_call.1} parent=5 // pred_check_branch
        %411 = sbr.rel (%p408) target = $region56
      $region55: #{tpu_custom_call.1} parent=5 // pred_region
        %s412 = ssub.s32 %s29, 1
        %s413 = sand.u32 %s54, 1
        %s414 = scalar_lea.sflag [#allocation4], %s413
        %s415 = sand.u32 %s54, 1
        %s416 = smul.addr %s415, 8
        %s417 = scalar_lea.vmem [#allocation3], %s416
        // Predicated region
        $region57: #{tpu_custom_call.1} parent=55 // pred_check
          %p418 = pneg %p67
        $region58: #{tpu_custom_call.1} parent=55 // pred_check_branch
          %420 = sbr.rel (%p418) target = $region60
        $region59: #{tpu_custom_call.1} parent=55 // pred_region
          %421 = dma.done %s414, 128
        $region60: #{tpu_custom_call.1} parent=55 // pred_fallthru
          _
        // Predicated region
        $region61: #{tpu_custom_call.1} parent=55 // pred_check
          %p422 = pneg %p88
        $region62: #{tpu_custom_call.1} parent=55 // pred_check_branch
          %424 = sbr.rel (%p422) target = $region64
        $region63: #{tpu_custom_call.1} parent=55 // pred_region
          %425 = dma.done [#allocation7], 256
        $region64: #{tpu_custom_call.1} parent=55 // pred_fallthru
          _
        // Predicated region
        $region65: #{tpu_custom_call.1} parent=55 // pred_check
          %p426 = pneg %p109
        $region66: #{tpu_custom_call.1} parent=55 // pred_check_branch
          %428 = sbr.rel (%p426) target = $region68
        $region67: #{tpu_custom_call.1} parent=55 // pred_region
          %429 = dma.done [#allocation7], 256
        $region68: #{tpu_custom_call.1} parent=55 // pred_fallthru
          _
        // Predicated region
        $region69: #{tpu_custom_call.1} parent=55 // pred_check
          %p430 = pneg %p130
        $region70: #{tpu_custom_call.1} parent=55 // pred_check_branch
          %432 = sbr.rel (%p430) target = $region72
        $region71: #{tpu_custom_call.1} parent=55 // pred_region
          %433 = dma.done [#allocation10], 256
        $region72: #{tpu_custom_call.1} parent=55 // pred_fallthru
          _
        %s434 = sand.u32 %s54, 1
        %s435 = scalar_lea.sflag [#allocation4], %s434
        %s436 = sand.u32 %s54, 1
        %s437 = smul.addr %s436, 8
        %s438 = scalar_lea.vmem [#allocation3], %s437
        %p439 = pneg %p67
        %p440 = pneg %p64
        %p441 = pneg %p88
        %p442 = pneg %p85
        %p443 = pneg %p109
        %p444 = pneg %p106
        %p445 = pneg %p130
        %p446 = pneg %p127
        %p447 = pneg %p151
        %p448 = pneg %p148
        %p449 = pneg %p172
        %p450 = pneg %p169
        %p451 = pneg %p193
        %p452 = pneg %p190
        %p453 = pneg %p214
        %p454 = pneg %p211
        %p455 = pneg %p235
        %p456 = pneg %p232
        %p457 = pneg %p263
        %p458 = pneg %p260
        %s459 = sand.u32 %s250, 1
        %s460 = scalar_lea.sflag [#allocation5], %s459
        %s461 = sand.u32 %s250, 1
        %s462 = smul.addr %s461, 8
        %s463 = scalar_lea.vmem [#allocation11], %s462
        %p464 = pneg %p289
        %p465 = pneg %p286
        %s466 = sand.u32 %s34, 1
        %s467 = scalar_lea.sflag [#allocation13], %s466
        %s468 = sand.u32 %s276, 1
        %s469 = smul.addr %s468, 8
        %s470 = scalar_lea.vmem [#allocation12], %s469
        %p471 = pneg %p315
        %p472 = pneg %p312
        %s473 = sand.u32 %s34, 1
        %s474 = scalar_lea.sflag [#allocation13], %s473
        %s475 = sand.u32 %s302, 1
        %s476 = smul.addr %s475, 8
        %s477 = scalar_lea.vmem [#allocation14], %s476
        %p479 = scmp.eq.s32.totalorder %s39, 0
        // Predicated region
        $region73: #{tpu_custom_call.1} parent=55 // pred_check
          %p480 = pneg %p479
        $region74: #{tpu_custom_call.1} parent=55 // pred_check_branch
          %482 = sbr.rel (%p480) target = $region76
        $region75: #{tpu_custom_call.1} parent=55 // pred_region
          %v483 = vld [vmem:[%s417] sm:$0xff]
          %v484 = vpack.c.bf16 %v483, %v483
          %v485 = vld [vmem:[#allocation8] sm:$0xf]
          %v486 = vld [vmem:[#allocation8 + $0x4] sm:$0xf]
          %v487 = vld [vmem:[#allocation8 + $0x8] sm:$0xf]
          %v488 = vld [vmem:[#allocation8 + $0xc] sm:$0xf]
          %v489 = vld [vmem:[%s5] sm:$0x1]
          %v491 = vlaneseq
          %v492 = vshrl.u32 %v491, 7
          %v493 = vsub.s32 0, %v492
          %v494 = vrot.slane %v489, %v493
          %v500 = vunpack.c.l.b16 %v485
          %v501 = vunpack.c.l.b16 %v486
          %v502 = vunpack.c.l.b16 %v487
          %v503 = vunpack.c.l.b16 %v488
          %v504 = vpack.c.b16 %v501, %v500
          %v505 = vpack.c.b16 %v503, %v502
          %vm508 = vcmask 261120
          %v510 = vsel %vm508, %v484, 0
          %512 = vmatprep.subr.bf16.mxu0 0
          %513 = vmatpush1.bf16.msra.mxu0 %v504
          %514 = vmatprep.subr.bf16.mxu0 0
          %515 = vmatpush1.bf16.msra.mxu0 %v505
          %516 = vmatprep.subr.bf16.mxu0 0
          %517 = vmatpush1.bf16.msra.mxu0 0
          %518 = vmatprep.subr.bf16.mxu0 0
          %519 = vmatpush1.bf16.msra.mxu0 0
          %520 = vmatprep.subr.bf16.mxu0 0
          %521 = vmatpush1.bf16.msra.mxu0 0
          %522 = vmatprep.subr.bf16.mxu0 0
          %523 = vmatpush1.bf16.msra.mxu0 0
          %524 = vmatprep.subr.bf16.mxu0 0
          %525 = vmatpush1.bf16.msra.mxu0 0
          %526 = vmatprep.subr.bf16.mxu0 0
          %527 = vmatpush1.bf16.msra.mxu0 0
          %528 = vmatprep.subr.bf16.mxu0 0
          %529 = vmatpush1.bf16.msra.mxu0 0
          %530 = vmatprep.subr.bf16.mxu0 0
          %531 = vmatpush1.bf16.msra.mxu0 0
          %532 = vmatprep.subr.bf16.mxu0 0
          %533 = vmatpush1.bf16.msra.mxu0 0
          %534 = vmatprep.subr.bf16.mxu0 0
          %535 = vmatpush1.bf16.msra.mxu0 0
          %536 = vmatprep.subr.bf16.mxu0 0
          %537 = vmatpush1.bf16.msra.mxu0 0
          %538 = vmatprep.subr.bf16.mxu0 0
          %539 = vmatpush1.bf16.msra.mxu0 0
          %540 = vmatprep.subr.bf16.mxu0 0
          %541 = vmatpush1.bf16.msra.mxu0 0
          %542 = vmatprep.subr.bf16.mxu0 0
          %543 = vmatpush1.bf16.msra.mxu0 0
          %544 = vmatprep.mubr.bf16.mxu0 0
          %545 = vmatmul.mubr.bf16.gmra.mrb[0].mxu0 %v510
          %v546 = vpop.f32.mrb[0].mxu0
          %v547 = vadd.f32 %v494, %v546
          %v548 = vpop.f32.mrb[0].mxu0
          %v549 = vpop.f32.mrb[0].mxu0
          %v550 = vpop.f32.mrb[0].mxu0
          %551 = vdwg.mxu0
          %v552 = vld [vmem:[#allocation9] sm:$0xf]
          %v553 = vld [vmem:[#allocation9 + $0x4] sm:$0xf]
          %v554 = vld [vmem:[#allocation9 + $0x8] sm:$0xf]
          %v555 = vld [vmem:[#allocation9 + $0xc] sm:$0xf]
          %v556 = vld [vmem:[%s6] sm:$0x1]
          %v558 = vlaneseq
          %v559 = vshrl.u32 %v558, 7
          %v560 = vsub.s32 0, %v559
          %v561 = vrot.slane %v556, %v560
          %v567 = vunpack.c.l.b16 %v552
          %v568 = vunpack.c.l.b16 %v553
          %v569 = vunpack.c.l.b16 %v554
          %v570 = vunpack.c.l.b16 %v555
          %v571 = vpack.c.b16 %v568, %v567
          %v572 = vpack.c.b16 %v570, %v569
          %575 = vmatprep.subr.bf16.mxu0 0
          %576 = vmatpush1.bf16.msra.mxu0 %v571
          %577 = vmatprep.subr.bf16.mxu0 0
          %578 = vmatpush1.bf16.msra.mxu0 %v572
          %579 = vmatprep.subr.bf16.mxu0 0
          %580 = vmatpush1.bf16.msra.mxu0 0
          %581 = vmatprep.subr.bf16.mxu0 0
          %582 = vmatpush1.bf16.msra.mxu0 0
          %583 = vmatprep.subr.bf16.mxu0 0
          %584 = vmatpush1.bf16.msra.mxu0 0
          %585 = vmatprep.subr.bf16.mxu0 0
          %586 = vmatpush1.bf16.msra.mxu0 0
          %587 = vmatprep.subr.bf16.mxu0 0
          %588 = vmatpush1.bf16.msra.mxu0 0
          %589 = vmatprep.subr.bf16.mxu0 0
          %590 = vmatpush1.bf16.msra.mxu0 0
          %591 = vmatprep.subr.bf16.mxu0 0
          %592 = vmatpush1.bf16.msra.mxu0 0
          %593 = vmatprep.subr.bf16.mxu0 0
          %594 = vmatpush1.bf16.msra.mxu0 0
          %595 = vmatprep.subr.bf16.mxu0 0
          %596 = vmatpush1.bf16.msra.mxu0 0
          %597 = vmatprep.subr.bf16.mxu0 0
          %598 = vmatpush1.bf16.msra.mxu0 0
          %599 = vmatprep.subr.bf16.mxu0 0
          %600 = vmatpush1.bf16.msra.mxu0 0
          %601 = vmatprep.subr.bf16.mxu0 0
          %602 = vmatpush1.bf16.msra.mxu0 0
          %603 = vmatprep.subr.bf16.mxu0 0
          %604 = vmatpush1.bf16.msra.mxu0 0
          %605 = vmatprep.subr.bf16.mxu0 0
          %606 = vmatpush1.bf16.msra.mxu0 0
          %607 = vmatprep.mubr.bf16.mxu0 0
          %608 = vmatmul.mubr.bf16.gmra.mrb[0].mxu0 %v510
          %v609 = vpop.f32.mrb[0].mxu0
          %v610 = vadd.f32 %v561, %v609
          %v611 = vpop.f32.mrb[0].mxu0
          %v612 = vpop.f32.mrb[0].mxu0
          %v613 = vpop.f32.mrb[0].mxu0
          %614 = vdwg.mxu0
          %615 = vst.msk [vmem:[%s470] sm:$0xff] %vm508, %v547
          %616 = vst.msk [vmem:[%s477] sm:$0xff] %vm508, %v610
        $region76: #{tpu_custom_call.1} parent=55 // pred_fallthru
          _
        %s617 = smul.u32 %s39, 8
        %s618 = scalar_lea.vmem %s417, %s617 [#allocation3]
        %v619 = vld [vmem:[%s618] sm:$0xff]
        %v620 = vpack.c.bf16 %v619, %v619
        %v621 = vld [vmem:[#allocation6] sm:$0xf]
        %v622 = vld [vmem:[#allocation6 + $0x4] sm:$0xf]
        %v623 = vld [vmem:[#allocation6 + $0x8] sm:$0xf]
        %v624 = vld [vmem:[#allocation6 + $0xc] sm:$0xf]
        %v625 = vld [vmem:[%s4] sm:$0x1]
        %v627 = vlaneseq
        %v628 = vshrl.u32 %v627, 7
        %v629 = vsub.s32 0, %v628
        %v630 = vrot.slane %v625, %v629
        %v636 = vunpack.c.l.b16 %v621
        %v637 = vunpack.c.l.b16 %v622
        %v638 = vunpack.c.l.b16 %v623
        %v639 = vunpack.c.l.b16 %v624
        %v640 = vpack.c.b16 %v637, %v636
        %v641 = vpack.c.b16 %v639, %v638
        %vm644 = vcmask 261120
        %v646 = vsel %vm644, %v620, 0
        %648 = vmatprep.subr.bf16.mxu0 0
        %649 = vmatpush1.bf16.msra.mxu0 %v640
        %650 = vmatprep.subr.bf16.mxu0 0
        %651 = vmatpush1.bf16.msra.mxu0 %v641
        %652 = vmatprep.subr.bf16.mxu0 0
        %653 = vmatpush1.bf16.msra.mxu0 0
        %654 = vmatprep.subr.bf16.mxu0 0
        %655 = vmatpush1.bf16.msra.mxu0 0
        %656 = vmatprep.subr.bf16.mxu0 0
        %657 = vmatpush1.bf16.msra.mxu0 0
        %658 = vmatprep.subr.bf16.mxu0 0
        %659 = vmatpush1.bf16.msra.mxu0 0
        %660 = vmatprep.subr.bf16.mxu0 0
        %661 = vmatpush1.bf16.msra.mxu0 0
        %662 = vmatprep.subr.bf16.mxu0 0
        %663 = vmatpush1.bf16.msra.mxu0 0
        %664 = vmatprep.subr.bf16.mxu0 0
        %665 = vmatpush1.bf16.msra.mxu0 0
        %666 = vmatprep.subr.bf16.mxu0 0
        %667 = vmatpush1.bf16.msra.mxu0 0
        %668 = vmatprep.subr.bf16.mxu0 0
        %669 = vmatpush1.bf16.msra.mxu0 0
        %670 = vmatprep.subr.bf16.mxu0 0
        %671 = vmatpush1.bf16.msra.mxu0 0
        %672 = vmatprep.subr.bf16.mxu0 0
        %673 = vmatpush1.bf16.msra.mxu0 0
        %674 = vmatprep.subr.bf16.mxu0 0
        %675 = vmatpush1.bf16.msra.mxu0 0
        %676 = vmatprep.subr.bf16.mxu0 0
        %677 = vmatpush1.bf16.msra.mxu0 0
        %678 = vmatprep.subr.bf16.mxu0 0
        %679 = vmatpush1.bf16.msra.mxu0 0
        %680 = vmatprep.mubr.bf16.mxu0 0
        %681 = vmatmul.mubr.bf16.gmra.mrb[0].mxu0 %v646
        %v682 = vpop.f32.mrb[0].mxu0
        %v683 = vadd.f32 %v630, %v682
        %v684 = vpop.f32.mrb[0].mxu0
        %v685 = vpop.f32.mrb[0].mxu0
        %v686 = vpop.f32.mrb[0].mxu0
        %687 = vdwg.mxu0
        %v688 = vmul.f32 %v683, 0.35355338
        %v689 = vpack.c.bf16 %v688, %v688
        %v690 = vld [vmem:[%s470] sm:$0xff]
        %v691 = vpack.c.bf16 %v690, %v690
        %v692 = vld [vmem:[%s477] sm:$0xff]
        %v693 = vpack.c.bf16 %v692, %v692
        %v694 = vlaneseq
        %v695 = vshrl.u32 %v694, 7
        %v696 = vstv %s617
        %v697 = vadd.s32 %v696, %v695
        %v698 = vlaneseq
        %v699 = vand.u32 %v698, 127
        %vm700 = vcmp.le.s32.totalorder %v699, %v697
        %vm701 = vcmask 64512
        %v703 = vsel %vm701, %v689, 0
        %v706 = vsel %vm701, %v691, 0
        %708 = vmatprep.subr.bf16.mxu0 0
        %709 = vmatpush1.bf16.xpose.msra.mxu0 %v706
        %710 = vmatprep.subr.bf16.mxu0 0
        %711 = vmatpush1.bf16.xpose.msra.mxu0 0
        %712 = vmatprep.subr.bf16.mxu0 0
        %713 = vmatpush1.bf16.xpose.msra.mxu0 0
        %714 = vmatprep.subr.bf16.mxu0 0
        %715 = vmatpush1.bf16.xpose.msra.mxu0 0
        %716 = vmatprep.subr.bf16.mxu0 0
        %717 = vmatpush1.bf16.xpose.msra.mxu0 0
        %718 = vmatprep.subr.bf16.mxu0 0
        %719 = vmatpush1.bf16.xpose.msra.mxu0 0
        %720 = vmatprep.subr.bf16.mxu0 0
        %721 = vmatpush1.bf16.xpose.msra.mxu0 0
        %722 = vmatprep.subr.bf16.mxu0 0
        %723 = vmatpush1.bf16.xpose.msra.mxu0 0
        %724 = vmatprep.subr.bf16.mxu0 0
        %725 = vmatpush1.bf16.xpose.msra.mxu0 0
        %726 = vmatprep.subr.bf16.mxu0 0
        %727 = vmatpush1.bf16.xpose.msra.mxu0 0
        %728 = vmatprep.subr.bf16.mxu0 0
        %729 = vmatpush1.bf16.xpose.msra.mxu0 0
        %730 = vmatprep.subr.bf16.mxu0 0
        %731 = vmatpush1.bf16.xpose.msra.mxu0 0
        %732 = vmatprep.subr.bf16.mxu0 0
        %733 = vmatpush1.bf16.xpose.msra.mxu0 0
        %734 = vmatprep.subr.bf16.mxu0 0
        %735 = vmatpush1.bf16.xpose.msra.mxu0 0
        %736 = vmatprep.subr.bf16.mxu0 0
        %737 = vmatpush1.bf16.xpose.msra.mxu0 0
        %738 = vmatprep.subr.bf16.mxu0 0
        %739 = vmatpush1.bf16.xpose.msra.mxu0 0
        %740 = vmatprep.mubr.bf16.mxu0 0
        %741 = vmatmul.mubr.bf16.gmra.mrb[0].mxu0 %v703
        %v742 = vpop.f32.mrb[0].mxu0
        %v743 = vadd.f32 0.0, %v742
        %v744 = vpop.f32.mrb[0].mxu0
        %v745 = vpop.f32.mrb[0].mxu0
        %v746 = vpop.f32.mrb[0].mxu0
        %747 = vdwg.mxu0
        %v748 = vsel %vm700, %v743, -1e+30
        %v749 = vsel %vm701, %v748, -inf
        %750 = vmax.xlane.f32.xlu0 %v749
        %v751 = vpop.xlane.xlu0 %750
        %v752 = vsub.f32 %v748, %v751
        %v753 = vmul.f32 %v752, 1.442695
        %v754 = vpow.pop %v753
        %v755 = vsel %vm701, %v754, 0.0
        %756 = vadd.xlane.f32.xlu0 %v755
        %v757 = vpop.xlane.xlu0 %756
        %v758 = vrcp.pop %v757
        %v759 = vmul.f32 %v754, %v758
        %v760 = vpack.c.bf16 %v759, %v759
        %v762 = vsel %vm701, %v760, 0
        %vm764 = vcmask 1043456
        %v766 = vsel %vm764, %v693, 0
        %768 = vmatprep.subr.bf16.mxu0 0
        %769 = vmatpush1.bf16.msra.mxu0 %v766
        %770 = vmatprep.subr.bf16.mxu0 0
        %771 = vmatpush1.bf16.msra.mxu0 0
        %772 = vmatprep.subr.bf16.mxu0 0
        %773 = vmatpush1.bf16.msra.mxu0 0
        %774 = vmatprep.subr.bf16.mxu0 0
        %775 = vmatpush1.bf16.msra.mxu0 0
        %776 = vmatprep.subr.bf16.mxu0 0
        %777 = vmatpush1.bf16.msra.mxu0 0
        %778 = vmatprep.subr.bf16.mxu0 0
        %779 = vmatpush1.bf16.msra.mxu0 0
        %780 = vmatprep.subr.bf16.mxu0 0
        %781 = vmatpush1.bf16.msra.mxu0 0
        %782 = vmatprep.subr.bf16.mxu0 0
        %783 = vmatpush1.bf16.msra.mxu0 0
        %784 = vmatprep.subr.bf16.mxu0 0
        %785 = vmatpush1.bf16.msra.mxu0 0
        %786 = vmatprep.subr.bf16.mxu0 0
        %787 = vmatpush1.bf16.msra.mxu0 0
        %788 = vmatprep.subr.bf16.mxu0 0
        %789 = vmatpush1.bf16.msra.mxu0 0
        %790 = vmatprep.subr.bf16.mxu0 0
        %791 = vmatpush1.bf16.msra.mxu0 0
        %792 = vmatprep.subr.bf16.mxu0 0
        %793 = vmatpush1.bf16.msra.mxu0 0
        %794 = vmatprep.subr.bf16.mxu0 0
        %795 = vmatpush1.bf16.msra.mxu0 0
        %796 = vmatprep.subr.bf16.mxu0 0
        %797 = vmatpush1.bf16.msra.mxu0 0
        %798 = vmatprep.subr.bf16.mxu0 0
        %799 = vmatpush1.bf16.msra.mxu0 0
        %800 = vmatprep.mubr.bf16.mxu0 0
        %801 = vmatmul.mubr.bf16.gmra.mrb[0].mxu0 %v762
        %v802 = vpop.f32.mrb[0].mxu0
        %v803 = vadd.f32 0.0, %v802
        %v804 = vpop.f32.mrb[0].mxu0
        %v805 = vpop.f32.mrb[0].mxu0
        %v806 = vpop.f32.mrb[0].mxu0
        %807 = vdwg.mxu0
        %808 = vst.msk [vmem:[#allocation2] sm:$0xff] %vm701, %v803
        %810 = vrot.lane.b32.xlu0 %v689, 120
        %v811 = vpop.permute.xlu0 %810
        %813 = vrot.lane.b32.xlu0 %v691, 120
        %v814 = vpop.permute.xlu0 %813
        %v816 = vsel %vm701, %v811, 0
        %v819 = vsel %vm701, %v814, 0
        %821 = vmatprep.subr.bf16.mxu0 0
        %822 = vmatpush1.bf16.xpose.msra.mxu0 %v819
        %823 = vmatprep.subr.bf16.mxu0 0
        %824 = vmatpush1.bf16.xpose.msra.mxu0 0
        %825 = vmatprep.subr.bf16.mxu0 0
        %826 = vmatpush1.bf16.xpose.msra.mxu0 0
        %827 = vmatprep.subr.bf16.mxu0 0
        %828 = vmatpush1.bf16.xpose.msra.mxu0 0
        %829 = vmatprep.subr.bf16.mxu0 0
        %830 = vmatpush1.bf16.xpose.msra.mxu0 0
        %831 = vmatprep.subr.bf16.mxu0 0
        %832 = vmatpush1.bf16.xpose.msra.mxu0 0
        %833 = vmatprep.subr.bf16.mxu0 0
        %834 = vmatpush1.bf16.xpose.msra.mxu0 0
        %835 = vmatprep.subr.bf16.mxu0 0
        %836 = vmatpush1.bf16.xpose.msra.mxu0 0
        %837 = vmatprep.subr.bf16.mxu0 0
        %838 = vmatpush1.bf16.xpose.msra.mxu0 0
        %839 = vmatprep.subr.bf16.mxu0 0
        %840 = vmatpush1.bf16.xpose.msra.mxu0 0
        %841 = vmatprep.subr.bf16.mxu0 0
        %842 = vmatpush1.bf16.xpose.msra.mxu0 0
        %843 = vmatprep.subr.bf16.mxu0 0
        %844 = vmatpush1.bf16.xpose.msra.mxu0 0
        %845 = vmatprep.subr.bf16.mxu0 0
        %846 = vmatpush1.bf16.xpose.msra.mxu0 0
        %847 = vmatprep.subr.bf16.mxu0 0
        %848 = vmatpush1.bf16.xpose.msra.mxu0 0
        %849 = vmatprep.subr.bf16.mxu0 0
        %850 = vmatpush1.bf16.xpose.msra.mxu0 0
        %851 = vmatprep.subr.bf16.mxu0 0
        %852 = vmatpush1.bf16.xpose.msra.mxu0 0
        %853 = vmatprep.mubr.bf16.mxu0 0
        %854 = vmatmul.mubr.bf16.gmra.mrb[0].mxu0 %v816
        %v855 = vpop.f32.mrb[0].mxu0
        %v856 = vadd.f32 0.0, %v855
        %v857 = vpop.f32.mrb[0].mxu0
        %v858 = vpop.f32.mrb[0].mxu0
        %v859 = vpop.f32.mrb[0].mxu0
        %860 = vdwg.mxu0
        %v861 = vsel %vm700, %v856, -1e+30
        %v862 = vsel %vm701, %v861, -inf
        %863 = vmax.xlane.f32.xlu0 %v862
        %v864 = vpop.xlane.xlu0 %863
        %v865 = vsub.f32 %v861, %v864
        %v866 = vmul.f32 %v865, 1.442695
        %v867 = vpow.pop %v866
        %v868 = vsel %vm701, %v867, 0.0
        %869 = vadd.xlane.f32.xlu0 %v868
        %v870 = vpop.xlane.xlu0 %869
        %v871 = vrcp.pop %v870
        %v872 = vmul.f32 %v867, %v871
        %v873 = vpack.c.bf16 %v872, %v872
        %875 = vrot.lane.b32.xlu0 %v693, 120
        %v876 = vpop.permute.xlu0 %875
        %v878 = vsel %vm701, %v873, 0
        %v881 = vsel %vm764, %v876, 0
        %883 = vmatprep.subr.bf16.mxu0 0
        %884 = vmatpush1.bf16.msra.mxu0 %v881
        %885 = vmatprep.subr.bf16.mxu0 0
        %886 = vmatpush1.bf16.msra.mxu0 0
        %887 = vmatprep.subr.bf16.mxu0 0
        %888 = vmatpush1.bf16.msra.mxu0 0
        %889 = vmatprep.subr.bf16.mxu0 0
        %890 = vmatpush1.bf16.msra.mxu0 0
        %891 = vmatprep.subr.bf16.mxu0 0
        %892 = vmatpush1.bf16.msra.mxu0 0
        %893 = vmatprep.subr.bf16.mxu0 0
        %894 = vmatpush1.bf16.msra.mxu0 0
        %895 = vmatprep.subr.bf16.mxu0 0
        %896 = vmatpush1.bf16.msra.mxu0 0
        %897 = vmatprep.subr.bf16.mxu0 0
        %898 = vmatpush1.bf16.msra.mxu0 0
        %899 = vmatprep.subr.bf16.mxu0 0
        %900 = vmatpush1.bf16.msra.mxu0 0
        %901 = vmatprep.subr.bf16.mxu0 0
        %902 = vmatpush1.bf16.msra.mxu0 0
        %903 = vmatprep.subr.bf16.mxu0 0
        %904 = vmatpush1.bf16.msra.mxu0 0
        %905 = vmatprep.subr.bf16.mxu0 0
        %906 = vmatpush1.bf16.msra.mxu0 0
        %907 = vmatprep.subr.bf16.mxu0 0
        %908 = vmatpush1.bf16.msra.mxu0 0
        %909 = vmatprep.subr.bf16.mxu0 0
        %910 = vmatpush1.bf16.msra.mxu0 0
        %911 = vmatprep.subr.bf16.mxu0 0
        %912 = vmatpush1.bf16.msra.mxu0 0
        %913 = vmatprep.subr.bf16.mxu0 0
        %914 = vmatpush1.bf16.msra.mxu0 0
        %915 = vmatprep.mubr.bf16.mxu0 0
        %916 = vmatmul.mubr.bf16.gmra.mrb[0].mxu0 %v878
        %v917 = vpop.f32.mrb[0].mxu0
        %v918 = vadd.f32 0.0, %v917
        %v919 = vpop.f32.mrb[0].mxu0
        %v920 = vpop.f32.mrb[0].mxu0
        %v921 = vpop.f32.mrb[0].mxu0
        %922 = vdwg.mxu0
        %924 = vrot.lane.b32.xlu0 %v918, 8
        %v925 = vpop.permute.xlu0 %924
        %vm927 = vcmask 130112
        %928 = vst.msk [vmem:[#allocation2] sm:$0xff] %vm927, %v925
        %929 = vrot.lane.b32.xlu0 %v689, 112
        %v930 = vpop.permute.xlu0 %929
        %931 = vrot.lane.b32.xlu0 %v691, 112
        %v932 = vpop.permute.xlu0 %931
        %v934 = vsel %vm701, %v930, 0
        %v937 = vsel %vm701, %v932, 0
        %939 = vmatprep.subr.bf16.mxu0 0
        %940 = vmatpush1.bf16.xpose.msra.mxu0 %v937
        %941 = vmatprep.subr.bf16.mxu0 0
        %942 = vmatpush1.bf16.xpose.msra.mxu0 0
        %943 = vmatprep.subr.bf16.mxu0 0
        %944 = vmatpush1.bf16.xpose.msra.mxu0 0
        %945 = vmatprep.subr.bf16.mxu0 0
        %946 = vmatpush1.bf16.xpose.msra.mxu0 0
        %947 = vmatprep.subr.bf16.mxu0 0
        %948 = vmatpush1.bf16.xpose.msra.mxu0 0
        %949 = vmatprep.subr.bf16.mxu0 0
        %950 = vmatpush1.bf16.xpose.msra.mxu0 0
        %951 = vmatprep.subr.bf16.mxu0 0
        %952 = vmatpush1.bf16.xpose.msra.mxu0 0
        %953 = vmatprep.subr.bf16.mxu0 0
        %954 = vmatpush1.bf16.xpose.msra.mxu0 0
        %955 = vmatprep.subr.bf16.mxu0 0
        %956 = vmatpush1.bf16.xpose.msra.mxu0 0
        %957 = vmatprep.subr.bf16.mxu0 0
        %958 = vmatpush1.bf16.xpose.msra.mxu0 0
        %959 = vmatprep.subr.bf16.mxu0 0
        %960 = vmatpush1.bf16.xpose.msra.mxu0 0
        %961 = vmatprep.subr.bf16.mxu0 0
        %962 = vmatpush1.bf16.xpose.msra.mxu0 0
        %963 = vmatprep.subr.bf16.mxu0 0
        %964 = vmatpush1.bf16.xpose.msra.mxu0 0
        %965 = vmatprep.subr.bf16.mxu0 0
        %966 = vmatpush1.bf16.xpose.msra.mxu0 0
        %967 = vmatprep.subr.bf16.mxu0 0
        %968 = vmatpush1.bf16.xpose.msra.mxu0 0
        %969 = vmatprep.subr.bf16.mxu0 0
        %970 = vmatpush1.bf16.xpose.msra.mxu0 0
        %971 = vmatprep.mubr.bf16.mxu0 0
        %972 = vmatmul.mubr.bf16.gmra.mrb[0].mxu0 %v934
        %v973 = vpop.f32.mrb[0].mxu0
        %v974 = vadd.f32 0.0, %v973
        %v975 = vpop.f32.mrb[0].mxu0
        %v976 = vpop.f32.mrb[0].mxu0
        %v977 = vpop.f32.mrb[0].mxu0
        %978 = vdwg.mxu0
        %v979 = vsel %vm700, %v974, -1e+30
        %v980 = vsel %vm701, %v979, -inf
        %981 = vmax.xlane.f32.xlu0 %v980
        %v982 = vpop.xlane.xlu0 %981
        %v983 = vsub.f32 %v979, %v982
        %v984 = vmul.f32 %v983, 1.442695
        %v985 = vpow.pop %v984
        %v986 = vsel %vm701, %v985, 0.0
        %987 = vadd.xlane.f32.xlu0 %v986
        %v988 = vpop.xlane.xlu0 %987
        %v989 = vrcp.pop %v988
        %v990 = vmul.f32 %v985, %v989
        %v991 = vpack.c.bf16 %v990, %v990
        %992 = vrot.lane.b32.xlu0 %v693, 112
        %v993 = vpop.permute.xlu0 %992
        %v995 = vsel %vm701, %v991, 0
        %v998 = vsel %vm764, %v993, 0
        %1000 = vmatprep.subr.bf16.mxu0 0
        %1001 = vmatpush1.bf16.msra.mxu0 %v998
        %1002 = vmatprep.subr.bf16.mxu0 0
        %1003 = vmatpush1.bf16.msra.mxu0 0
        %1004 = vmatprep.subr.bf16.mxu0 0
        %1005 = vmatpush1.bf16.msra.mxu0 0
        %1006 = vmatprep.subr.bf16.mxu0 0
        %1007 = vmatpush1.bf16.msra.mxu0 0
        %1008 = vmatprep.subr.bf16.mxu0 0
        %1009 = vmatpush1.bf16.msra.mxu0 0
        %1010 = vmatprep.subr.bf16.mxu0 0
        %1011 = vmatpush1.bf16.msra.mxu0 0
        %1012 = vmatprep.subr.bf16.mxu0 0
        %1013 = vmatpush1.bf16.msra.mxu0 0
        %1014 = vmatprep.subr.bf16.mxu0 0
        %1015 = vmatpush1.bf16.msra.mxu0 0
        %1016 = vmatprep.subr.bf16.mxu0 0
        %1017 = vmatpush1.bf16.msra.mxu0 0
        %1018 = vmatprep.subr.bf16.mxu0 0
        %1019 = vmatpush1.bf16.msra.mxu0 0
        %1020 = vmatprep.subr.bf16.mxu0 0
        %1021 = vmatpush1.bf16.msra.mxu0 0
        %1022 = vmatprep.subr.bf16.mxu0 0
        %1023 = vmatpush1.bf16.msra.mxu0 0
        %1024 = vmatprep.subr.bf16.mxu0 0
        %1025 = vmatpush1.bf16.msra.mxu0 0
        %1026 = vmatprep.subr.bf16.mxu0 0
        %1027 = vmatpush1.bf16.msra.mxu0 0
        %1028 = vmatprep.subr.bf16.mxu0 0
        %1029 = vmatpush1.bf16.msra.mxu0 0
        %1030 = vmatprep.subr.bf16.mxu0 0
        %1031 = vmatpush1.bf16.msra.mxu0 0
        %1032 = vmatprep.mubr.bf16.mxu0 0
        %1033 = vmatmul.mubr.bf16.gmra.mrb[0].mxu0 %v995
        %v1034 = vpop.f32.mrb[0].mxu0
        %v1035 = vadd.f32 0.0, %v1034
        %v1036 = vpop.f32.mrb[0].mxu0
        %v1037 = vpop.f32.mrb[0].mxu0
        %v1038 = vpop.f32.mrb[0].mxu0
        %1039 = vdwg.mxu0
        %1041 = vrot.lane.b32.xlu0 %v1035, 16
        %v1042 = vpop.permute.xlu0 %1041
        %vm1044 = vcmask 195712
        %1045 = vst.msk [vmem:[#allocation2] sm:$0xff] %vm1044, %v1042
        %1046 = vrot.lane.b32.xlu0 %v689, 104
        %v1047 = vpop.permute.xlu0 %1046
        %1048 = vrot.lane.b32.xlu0 %v691, 104
        %v1049 = vpop.permute.xlu0 %1048
        %v1051 = vsel %vm701, %v1047, 0
        %v1054 = vsel %vm701, %v1049, 0
        %1056 = vmatprep.subr.bf16.mxu0 0
        %1057 = vmatpush1.bf16.xpose.msra.mxu0 %v1054
        %1058 = vmatprep.subr.bf16.mxu0 0
        %1059 = vmatpush1.bf16.xpose.msra.mxu0 0
        %1060 = vmatprep.subr.bf16.mxu0 0
        %1061 = vmatpush1.bf16.xpose.msra.mxu0 0
        %1062 = vmatprep.subr.bf16.mxu0 0
        %1063 = vmatpush1.bf16.xpose.msra.mxu0 0
        %1064 = vmatprep.subr.bf16.mxu0 0
        %1065 = vmatpush1.bf16.xpose.msra.mxu0 0
        %1066 = vmatprep.subr.bf16.mxu0 0
        %1067 = vmatpush1.bf16.xpose.msra.mxu0 0
        %1068 = vmatprep.subr.bf16.mxu0 0
        %1069 = vmatpush1.bf16.xpose.msra.mxu0 0
        %1070 = vmatprep.subr.bf16.mxu0 0
        %1071 = vmatpush1.bf16.xpose.msra.mxu0 0
        %1072 = vmatprep.subr.bf16.mxu0 0
        %1073 = vmatpush1.bf16.xpose.msra.mxu0 0
        %1074 = vmatprep.subr.bf16.mxu0 0
        %1075 = vmatpush1.bf16.xpose.msra.mxu0 0
        %1076 = vmatprep.subr.bf16.mxu0 0
        %1077 = vmatpush1.bf16.xpose.msra.mxu0 0
        %1078 = vmatprep.subr.bf16.mxu0 0
        %1079 = vmatpush1.bf16.xpose.msra.mxu0 0
        %1080 = vmatprep.subr.bf16.mxu0 0
        %1081 = vmatpush1.bf16.xpose.msra.mxu0 0
        %1082 = vmatprep.subr.bf16.mxu0 0
        %1083 = vmatpush1.bf16.xpose.msra.mxu0 0
        %1084 = vmatprep.subr.bf16.mxu0 0
        %1085 = vmatpush1.bf16.xpose.msra.mxu0 0
        %1086 = vmatprep.subr.bf16.mxu0 0
        %1087 = vmatpush1.bf16.xpose.msra.mxu0 0
        %1088 = vmatprep.mubr.bf16.mxu0 0
        %1089 = vmatmul.mubr.bf16.gmra.mrb[0].mxu0 %v1051
        %v1090 = vpop.f32.mrb[0].mxu0
        %v1091 = vadd.f32 0.0, %v1090
        %v1092 = vpop.f32.mrb[0].mxu0
        %v1093 = vpop.f32.mrb[0].mxu0
        %v1094 = vpop.f32.mrb[0].mxu0
        %1095 = vdwg.mxu0
        %v1096 = vsel %vm700, %v1091, -1e+30
        %v1097 = vsel %vm701, %v1096, -inf
        %1098 = vmax.xlane.f32.xlu0 %v1097
        %v1099 = vpop.xlane.xlu0 %1098
        %v1100 = vsub.f32 %v1096, %v1099
        %v1101 = vmul.f32 %v1100, 1.442695
        %v1102 = vpow.pop %v1101
        %v1103 = vsel %vm701, %v1102, 0.0
        %1104 = vadd.xlane.f32.xlu0 %v1103
        %v1105 = vpop.xlane.xlu0 %1104
        %v1106 = vrcp.pop %v1105
        %v1107 = vmul.f32 %v1102, %v1106
        %v1108 = vpack.c.bf16 %v1107, %v1107
        %1109 = vrot.lane.b32.xlu0 %v693, 104
        %v1110 = vpop.permute.xlu0 %1109
        %v1112 = vsel %vm701, %v1108, 0
        %v1115 = vsel %vm764, %v1110, 0
        %1117 = vmatprep.subr.bf16.mxu0 0
        %1118 = vmatpush1.bf16.msra.mxu0 %v1115
        %1119 = vmatprep.subr.bf16.mxu0 0
        %1120 = vmatpush1.bf16.msra.mxu0 0
        %1121 = vmatprep.subr.bf16.mxu0 0
        %1122 = vmatpush1.bf16.msra.mxu0 0
        %1123 = vmatprep.subr.bf16.mxu0 0
        %1124 = vmatpush1.bf16.msra.mxu0 0
        %1125 = vmatprep.subr.bf16.mxu0 0
        %1126 = vmatpush1.bf16.msra.mxu0 0
        %1127 = vmatprep.subr.bf16.mxu0 0
        %1128 = vmatpush1.bf16.msra.mxu0 0
        %1129 = vmatprep.subr.bf16.mxu0 0
        %1130 = vmatpush1.bf16.msra.mxu0 0
        %1131 = vmatprep.subr.bf16.mxu0 0
        %1132 = vmatpush1.bf16.msra.mxu0 0
        %1133 = vmatprep.subr.bf16.mxu0 0
        %1134 = vmatpush1.bf16.msra.mxu0 0
        %1135 = vmatprep.subr.bf16.mxu0 0
        %1136 = vmatpush1.bf16.msra.mxu0 0
        %1137 = vmatprep.subr.bf16.mxu0 0
        %1138 = vmatpush1.bf16.msra.mxu0 0
        %1139 = vmatprep.subr.bf16.mxu0 0
        %1140 = vmatpush1.bf16.msra.mxu0 0
        %1141 = vmatprep.subr.bf16.mxu0 0
        %1142 = vmatpush1.bf16.msra.mxu0 0
        %1143 = vmatprep.subr.bf16.mxu0 0
        %1144 = vmatpush1.bf16.msra.mxu0 0
        %1145 = vmatprep.subr.bf16.mxu0 0
        %1146 = vmatpush1.bf16.msra.mxu0 0
        %1147 = vmatprep.subr.bf16.mxu0 0
        %1148 = vmatpush1.bf16.msra.mxu0 0
        %1149 = vmatprep.mubr.bf16.mxu0 0
        %1150 = vmatmul.mubr.bf16.gmra.mrb[0].mxu0 %v1112
        %v1151 = vpop.f32.mrb[0].mxu0
        %v1152 = vadd.f32 0.0, %v1151
        %v1153 = vpop.f32.mrb[0].mxu0
        %v1154 = vpop.f32.mrb[0].mxu0
        %v1155 = vpop.f32.mrb[0].mxu0
        %1156 = vdwg.mxu0
        %1158 = vrot.lane.b32.xlu0 %v1152, 24
        %v1159 = vpop.permute.xlu0 %1158
        %vm1161 = vcmask 261312
        %1162 = vst.msk [vmem:[#allocation2] sm:$0xff] %vm1161, %v1159
        %v1163 = vld [vmem:[#allocation2] sm:$0xff]
        %v1164 = vpack.c.bf16 %v1163, %v1163
        %v1165 = vld [vmem:[%s7] sm:$0xf]
        %v1166 = vld [vmem:[%s7 + $0x4] sm:$0xf]
        %v1167 = vld [vmem:[%s7 + $0x8] sm:$0xf]
        %v1168 = vld [vmem:[%s7 + $0xc] sm:$0xf]
        %v1169 = vld [vmem:[%s8] sm:$0x1]
        %v1171 = vlaneseq
        %v1172 = vshrl.u32 %v1171, 7
        %v1173 = vsub.s32 0, %v1172
        %v1174 = vrot.slane %v1169, %v1173
        %v1180 = vunpack.c.l.b16 %v1165
        %v1181 = vunpack.c.l.b16 %v1166
        %v1182 = vunpack.c.l.b16 %v1167
        %v1183 = vunpack.c.l.b16 %v1168
        %v1184 = vpack.c.b16 %v1181, %v1180
        %v1185 = vpack.c.b16 %v1183, %v1182
        %v1189 = vsel %vm644, %v1164, 0
        %1191 = vmatprep.subr.bf16.mxu0 0
        %1192 = vmatpush1.bf16.msra.mxu0 %v1184
        %1193 = vmatprep.subr.bf16.mxu0 0
        %1194 = vmatpush1.bf16.msra.mxu0 %v1185
        %1195 = vmatprep.subr.bf16.mxu0 0
        %1196 = vmatpush1.bf16.msra.mxu0 0
        %1197 = vmatprep.subr.bf16.mxu0 0
        %1198 = vmatpush1.bf16.msra.mxu0 0
        %1199 = vmatprep.subr.bf16.mxu0 0
        %1200 = vmatpush1.bf16.msra.mxu0 0
        %1201 = vmatprep.subr.bf16.mxu0 0
        %1202 = vmatpush1.bf16.msra.mxu0 0
        %1203 = vmatprep.subr.bf16.mxu0 0
        %1204 = vmatpush1.bf16.msra.mxu0 0
        %1205 = vmatprep.subr.bf16.mxu0 0
        %1206 = vmatpush1.bf16.msra.mxu0 0
        %1207 = vmatprep.subr.bf16.mxu0 0
        %1208 = vmatpush1.bf16.msra.mxu0 0
        %1209 = vmatprep.subr.bf16.mxu0 0
        %1210 = vmatpush1.bf16.msra.mxu0 0
        %1211 = vmatprep.subr.bf16.mxu0 0
        %1212 = vmatpush1.bf16.msra.mxu0 0
        %1213 = vmatprep.subr.bf16.mxu0 0
        %1214 = vmatpush1.bf16.msra.mxu0 0
        %1215 = vmatprep.subr.bf16.mxu0 0
        %1216 = vmatpush1.bf16.msra.mxu0 0
        %1217 = vmatprep.subr.bf16.mxu0 0
        %1218 = vmatpush1.bf16.msra.mxu0 0
        %1219 = vmatprep.subr.bf16.mxu0 0
        %1220 = vmatpush1.bf16.msra.mxu0 0
        %1221 = vmatprep.subr.bf16.mxu0 0
        %1222 = vmatpush1.bf16.msra.mxu0 0
        %1223 = vmatprep.mubr.bf16.mxu0 0
        %1224 = vmatmul.mubr.bf16.gmra.mrb[0].mxu0 %v1189
        %v1225 = vpop.f32.mrb[0].mxu0
        %v1226 = vadd.f32 %v1174, %v1225
        %v1227 = vpop.f32.mrb[0].mxu0
        %v1228 = vpop.f32.mrb[0].mxu0
        %v1229 = vpop.f32.mrb[0].mxu0
        %1230 = vdwg.mxu0
        %1231 = vst.msk [vmem:[%s463] sm:$0xff] %vm644, %v1226
        %s1232 = sand.u32 %s250, 1
        %s1233 = scalar_lea.sflag [#allocation5], %s1232
        %s1234 = sand.u32 %s250, 1
        %s1235 = smul.addr %s1234, 8
        %s1236 = scalar_lea.vmem [#allocation11], %s1235
        %s1237 = sand.u32 %s34, 1
        %s1238 = scalar_lea.sflag [#allocation13], %s1237
        %s1239 = sand.u32 %s276, 1
        %s1240 = smul.addr %s1239, 8
        %s1241 = scalar_lea.vmem [#allocation12], %s1240
        %s1242 = sand.u32 %s34, 1
        %s1243 = scalar_lea.sflag [#allocation13], %s1242
        %s1244 = sand.u32 %s302, 1
        %s1245 = smul.addr %s1244, 8
        %s1246 = scalar_lea.vmem [#allocation14], %s1245
        // Predicated region
        $region77: #{tpu_custom_call.1} parent=55 // pred_check
          %p1247 = pneg %p260
        $region78: #{tpu_custom_call.1} parent=55 // pred_check_branch
          %1249 = sbr.rel (%p1247) target = $region80
        $region79: #{tpu_custom_call.1} parent=55 // pred_region
          %s1251 = ssub.s32 128, 128
          %1252 = vsyncadd %s1233, %s1251
          %s1253 = sadd.s32 %s39, %s38
          %s1254 = smul.addr %s1253, 128
          %s1255 = scalar_lea.hbm %s9, %s1254
          %s1257 = sshll.u32 %s1236, 4
          %s1258 = int_to_ptr.vmem [resolvable:$true] %s1257
          %1260 = dma.vmem_to_hbm [thread:$0]  %s1258, 128, %s1255, %s1233
        $region80: #{tpu_custom_call.1} parent=55 // pred_fallthru
          _
        // Predicated region
        $region81: #{tpu_custom_call.1} parent=55 // pred_check
          %p1261 = pneg %p286
        $region82: #{tpu_custom_call.1} parent=55 // pred_check_branch
          %1263 = sbr.rel (%p1261) target = $region84
        $region83: #{tpu_custom_call.1} parent=55 // pred_region
          %s1265 = ssub.s32 128, 128
          %1266 = vsyncadd %s1238, %s1265
          %s1267 = smul.addr %s38, 128
          %s1268 = scalar_lea.hbm %s10, %s1267
          %s1270 = sshll.u32 %s1241, 4
          %s1271 = int_to_ptr.vmem [resolvable:$true] %s1270
          %1273 = dma.vmem_to_hbm [thread:$0]  %s1271, 128, %s1268, %s1238
        $region84: #{tpu_custom_call.1} parent=55 // pred_fallthru
          _
        // Predicated region
        $region85: #{tpu_custom_call.1} parent=55 // pred_check
          %p1274 = pneg %p312
        $region86: #{tpu_custom_call.1} parent=55 // pred_check_branch
          %1276 = sbr.rel (%p1274) target = $region88
        $region87: #{tpu_custom_call.1} parent=55 // pred_region
          %s1278 = ssub.s32 128, 128
          %1279 = vsyncadd %s1243, %s1278
          %s1280 = smul.addr %s38, 128
          %s1281 = scalar_lea.hbm %s11, %s1280
          %s1283 = sshll.u32 %s1246, 4
          %s1284 = int_to_ptr.vmem [resolvable:$true] %s1283
          %1286 = dma.vmem_to_hbm [thread:$0]  %s1284, 128, %s1281, %s1243
        $region88: #{tpu_custom_call.1} parent=55 // pred_fallthru
          _
      $region56: #{tpu_custom_call.1} parent=5 // pred_fallthru
        _
      %p1287 = scmp.le.s32.totalorder 2, %s29
      // Predicated region
      $region89: #{tpu_custom_call.1} parent=5 // pred_check
        %p1288 = pneg %p1287
      $region90: #{tpu_custom_call.1} parent=5 // pred_check_branch
        %1290 = sbr.rel (%p1288) target = $region92
      $region91: #{tpu_custom_call.1} parent=5 // pred_region
        %s1291 = ssub.s32 %s29, 2
        // Predicated region
        $region93: #{tpu_custom_call.1} parent=91 // pred_check
          %p1292 = pneg %p266
        $region94: #{tpu_custom_call.1} parent=91 // pred_check_branch
          %1294 = sbr.rel (%p1292) target = $region96
        $region95: #{tpu_custom_call.1} parent=91 // pred_region
          %s1295 = sand.u32 %s251, 1
          %s1296 = scalar_lea.sflag [#allocation5], %s1295
          %s1297 = sand.u32 %s251, 1
          %s1298 = smul.addr %s1297, 8
          %s1299 = scalar_lea.vmem [#allocation11], %s1298
          %1300 = dma.done %s1296, 128
        $region96: #{tpu_custom_call.1} parent=91 // pred_fallthru
          _
        // Predicated region
        $region97: #{tpu_custom_call.1} parent=91 // pred_check
          %p1301 = pneg %p292
        $region98: #{tpu_custom_call.1} parent=91 // pred_check_branch
          %1303 = sbr.rel (%p1301) target = $region100
        $region99: #{tpu_custom_call.1} parent=91 // pred_region
          %s1304 = sand.u32 %s35, 1
          %s1305 = scalar_lea.sflag [#allocation13], %s1304
          %s1306 = sand.u32 %s277, 1
          %s1307 = smul.addr %s1306, 8
          %s1308 = scalar_lea.vmem [#allocation12], %s1307
          %1309 = dma.done %s1305, 128
        $region100: #{tpu_custom_call.1} parent=91 // pred_fallthru
          _
        // Predicated region
        $region101: #{tpu_custom_call.1} parent=91 // pred_check
          %p1310 = pneg %p318
        $region102: #{tpu_custom_call.1} parent=91 // pred_check_branch
          %1312 = sbr.rel (%p1310) target = $region104
        $region103: #{tpu_custom_call.1} parent=91 // pred_region
          %s1313 = sand.u32 %s35, 1
          %s1314 = scalar_lea.sflag [#allocation13], %s1313
          %s1315 = sand.u32 %s303, 1
          %s1316 = smul.addr %s1315, 8
          %s1317 = scalar_lea.vmem [#allocation14], %s1316
          %1318 = dma.done %s1314, 128
        $region104: #{tpu_custom_call.1} parent=91 // pred_fallthru
          _
      $region92: #{tpu_custom_call.1} parent=5 // pred_fallthru
        _
    $region6: #{tpu_custom_call.1} parent=1 // loop_footer
      %s33 = sadd.s32 1, %s29
    $region7: #{tpu_custom_call.1} parent=1 // loop_footer_branch
      %28 = sbr.rel target = $region3
    $region8: #{tpu_custom_call.1} parent=1 // loop_exit
      _
    %1319 = vsyncpa [#allocation4], 1
    %s1320 = scalar_lea.sflag [#allocation4], 1
    %1321 = vsyncpa %s1320, 1
    %1322 = vsyncpa [#allocation7], 1
    %1323 = vsyncpa [#allocation10], 1
    %1324 = vsyncpa [#allocation5], 1
    %s1325 = scalar_lea.sflag [#allocation5], 1
    %1326 = vsyncpa %s1325, 1
    %1327 = vsyncpa [#allocation13], 1
    %s1328 = scalar_lea.sflag [#allocation13], 1
    %1329 = vsyncpa %s1328, 1

</llo_original>
